<compile_context>
chip_gen: v7x
topology: tpu7x:2x2x1
jax: 0.10.0
libtpu: 0.0.40
codegen_flags: <defaults>
</compile_context>

<pallas_src>
import functools

import jax
import jax.numpy as jnp
from jax.experimental import pallas as pl
from jax.experimental.pallas import tpu as pltpu


CFG = dict(
    hidden=64, n_heads=2, head_dim=32, n_layers=2, mlp=256,
    text_vocab=256, speech_vocab=512,
    max_text_tokens=32, max_speech_tokens=64,
    speech_cond_prompt_len=4, speaker_emb_dim=32,
)
IGNORE_ID = -100


def _rms(x, scale, eps=1e-6):
    var = jnp.mean(x * x, axis=-1, keepdims=True)
    return x * jax.lax.rsqrt(var + eps) * scale


# ----------------------------------------------------------------------------
# Kernel 1: ALL transformer layers in one pallas_call.
#   grid = (B, n_layers); batch axis "parallel", layer axis "arbitrary".
#   The residual stream stays resident in the output VMEM block across the
#   layer axis (output block index constant in l) -> no HBM traffic between
#   layers, writeback happens once per batch element.
# ----------------------------------------------------------------------------
def _layers_kernel(x_ref, vec_d_ref, vec_m_ref, wqkv_ref, wo_ref,
                   w1_ref, w2_ref, o_ref, attn_scr, *, H, Dh, scale):
    # first layer of this batch element: seed residual stream from the input.
    @pl.when(pl.program_id(1) == 0)
    def _():
        o_ref[0] = x_ref[0]

    x = o_ref[0]                                   # (Lp, D) f32 residual
    Lp, D = x.shape

    vd = vec_d_ref[0]                              # (3, D): ln1 | ln2 | b2
    ln1 = vd[0:1, :]
    ln2 = vd[1:2, :]
    b2 = vd[2:3, :]
    b1 = vec_m_ref[0]                              # (1, Dm)

    # ---- attention block -----------------------------------------------
    h = _rms(x, ln1)
    # fused QKV projection: bf16 operands (weights already bf16), f32 accumulate
    qkv = jnp.dot(h.astype(jnp.bfloat16), wqkv_ref[0],
                  preferred_element_type=jnp.float32)      # (Lp, 3D) f32
    qkv_bf = qkv.astype(jnp.bfloat16)              # single cast, reused per head

    row = jax.lax.broadcasted_iota(jnp.int32, (Lp, Lp), 0)
    col = jax.lax.broadcasted_iota(jnp.int32, (Lp, Lp), 1)
    causal = col <= row

    # TODO(synk): at real T3 sizes (Lp~1k, Dh=64) replace with KV-tiled
    # flash-style attention; whole (Lp,Lp) scores per head won't fit then.
    for hd in range(H):                             # static unroll; heads stay in VMEM
        q = qkv_bf[:, hd * Dh:(hd + 1) * Dh]
        k = qkv_bf[:, D + hd * Dh:D + (hd + 1) * Dh]
        v = qkv_bf[:, 2 * D + hd * Dh:2 * D + (hd + 1) * Dh]
        s = jax.lax.dot_general(q, k, (((1,), (1,)), ((), ())),
                                preferred_element_type=jnp.float32) * scale
        s = jnp.where(causal, s, -1e30)             # causal mask
        m = jnp.max(s, axis=-1, keepdims=True)
        p = jnp.exp(s - m)                          # un-normalized probs
        denom = jnp.sum(p, axis=-1, keepdims=True)
        o_h = jnp.dot(p.astype(jnp.bfloat16), v,
                      preferred_element_type=jnp.float32)  # (Lp, Dh)
        # normalize after PV: (Lp,Dh) multiplies instead of (Lp,Lp)
        o_h = o_h * pl.reciprocal(denom, approx=True)
        attn_scr[:, hd * Dh:(hd + 1) * Dh] = o_h

    # single O-projection over all heads (one MXU push, full contraction depth)
    attn_proj = jnp.dot(attn_scr[...].astype(jnp.bfloat16), wo_ref[0],
                        preferred_element_type=jnp.float32)  # (Lp, D)
    x = x + attn_proj

    # ---- MLP block (SiLU) ------------------------------------------------
    h2 = _rms(x, ln2)
    mid = jnp.dot(h2.astype(jnp.bfloat16), w1_ref[0],
                  preferred_element_type=jnp.float32) + b1
    mid = mid * jax.nn.sigmoid(mid)                 # SiLU, f32 on the VPU
    x = x + jnp.dot(mid.astype(jnp.bfloat16), w2_ref[0],
                    preferred_element_type=jnp.float32) + b2

    o_ref[0] = x                                    # residual carried in VMEM


def fused_backbone(x, stacked, *, H, Dh):
    """x: (B, Lp, D) f32 -> (B, Lp, D) f32.  ONE pallas_call for all layers."""
    B, Lp, D = x.shape
    nL = stacked["wqkv"].shape[0]
    Dm = stacked["w1"].shape[2]
    kern = functools.partial(_layers_kernel, H=H, Dh=Dh, scale=1.0 / (Dh ** 0.5))

    def lyr(shape):
        return pl.BlockSpec(shape, lambda b, l: (l, 0, 0))

    return pl.pallas_call(
        kern,
        out_shape=jax.ShapeDtypeStruct((B, Lp, D), jnp.float32),
        grid=(B, nL),
        in_specs=[
            pl.BlockSpec((1, Lp, D), lambda b, l: (b, 0, 0)),   # x (used @ l==0)
            lyr((1, 3, D)),                                     # ln1 | ln2 | b2
            lyr((1, 1, Dm)),                                    # b1
            lyr((1, D, 3 * D)),                                 # wqkv (bf16)
            lyr((1, D, D)),                                     # wo   (bf16)
            lyr((1, D, Dm)),                                    # w1   (bf16)
            lyr((1, Dm, D)),                                    # w2   (bf16)
        ],
        out_specs=pl.BlockSpec((1, Lp, D), lambda b, l: (b, 0, 0)),
        scratch_shapes=[pltpu.VMEM((Lp, D), jnp.float32)],      # per-head concat
        compiler_params=pltpu.CompilerParams(
            dimension_semantics=("parallel", "arbitrary")),     # v7x: batch on 2 TCs
    )(x, stacked["vec_d"], stacked["vec_m"], stacked["wqkv"],
      stacked["wo"], stacked["w1"], stacked["w2"])


# ----------------------------------------------------------------------------
# Kernel 2: final rmsnorm + text/speech heads + masked CE + loss combine.
# ----------------------------------------------------------------------------
def _heads_ce_kernel(fnorm_ref, tlat_ref, tlab_ref, thw_ref, thb_ref,
                     slat_ref, slab_ref, shw_ref, shb_ref,
                     sp_logits_ref, loss_ref):
    fnorm = fnorm_ref[...]

    def ce_terms(logits, labels):
        # masked CE, ignore_index = -100 (PyTorch semantics), no one-hot tensor
        m = jnp.max(logits, axis=-1, keepdims=True)
        sh = logits - m
        lse = jnp.log(jnp.sum(jnp.exp(sh), axis=-1, keepdims=True))
        logp = sh - lse
        col = jax.lax.broadcasted_iota(jnp.int32, logits.shape, 1)
        valid = labels != IGNORE_ID                                  # (R, 1)
        picked = jnp.where((col == labels) & valid, logp, 0.0)       # (R, V)
        nll = -jnp.sum(picked, keepdims=True)                        # (1, 1)
        nvalid = jnp.sum(valid.astype(jnp.float32), keepdims=True)   # (1, 1)
        return nll, nvalid

    # text head + CE : logits never leave VMEM
    tlat = _rms(tlat_ref[...], fnorm)
    t_logits = jnp.dot(tlat.astype(jnp.bfloat16), thw_ref[...],
                       preferred_element_type=jnp.float32) + thb_ref[...]
    lt, ct = ce_terms(t_logits, tlab_ref[...])

    # speech head (logits are a module output, so they are materialized) + CE
    slat = _rms(slat_ref[...], fnorm)
    s_logits = jnp.dot(slat.astype(jnp.bfloat16), shw_ref[...],
                       preferred_element_type=jnp.float32) + shb_ref[...]
    sp_logits_ref[...] = s_logits
    ls, cs = ce_terms(s_logits, slab_ref[...])

    loss_ref[...] = lt / jnp.maximum(ct, 1.0) + ls / jnp.maximum(cs, 1.0)


def pallas_heads_and_loss(fnorm, text_lat, text_labels, thw, thb,
                          speech_lat, speech_labels, shw, shb):
    Rt, D = text_lat.shape
    Rs, _ = speech_lat.shape
    Vt = thw.shape[1]
    Vs = shw.shape[1]

    def spec(shape):
        return pl.BlockSpec(shape, lambda i: (0, 0))

    # TODO(synk): at real T3 sizes (Rs~2k, Vs~8k) tile rows x vocab with a VMEM
    # partial-sum/LSE scratch; the whole-slab f32 logits here would blow 64 MiB
    # VMEM on v7x.
    sp_logits, loss = pl.pallas_call(
        _heads_ce_kernel,
        out_shape=(jax.ShapeDtypeStruct((Rs, Vs), jnp.float32),
                   jax.ShapeDtypeStruct((1, 1), jnp.float32)),
        grid=(1,),
        in_specs=[spec((1, D)),
                  spec((Rt, D)), spec((Rt, 1)), spec((D, Vt)), spec((1, Vt)),
                  spec((Rs, D)), spec((Rs, 1)), spec((D, Vs)), spec((1, Vs))],
        out_specs=(spec((Rs, Vs)), spec((1, 1))),
    )(fnorm.reshape(1, D),
      text_lat, text_labels.reshape(Rt, 1).astype(jnp.int32),
      thw, thb.reshape(1, Vt),
      speech_lat, speech_labels.reshape(Rs, 1).astype(jnp.int32),
      shw, shb.reshape(1, Vs))
    return sp_logits, loss[0, 0]


# ----------------------------------------------------------------------------
# Synthetic T3 model (small Llama-style backbone), deterministic init
# ----------------------------------------------------------------------------
def init_params(key):
    c = CFG
    D, Dm, nL = c["hidden"], c["mlp"], c["n_layers"]

    def dense(k, fan_in, fan_out):
        return jax.random.normal(k, (fan_in, fan_out), jnp.float32) * 0.02

    keys = iter(jax.random.split(key, 64))
    p = {
        "spk_w": dense(next(keys), c["speaker_emb_dim"], D),
        "spk_b": jnp.zeros((D,), jnp.float32),
        "emo_w": dense(next(keys), 1, D),
        "emo_b": jnp.zeros((D,), jnp.float32),
        "text_emb": dense(next(keys), c["text_vocab"], D),
        "speech_emb": dense(next(keys), c["speech_vocab"], D),
        "text_pos": dense(next(keys), c["max_text_tokens"], D),
        "speech_pos": dense(next(keys), c["max_speech_tokens"], D),
        "final_norm": jnp.ones((D,), jnp.float32),
        # head weights stored bf16 once -> no per-forward cast ops
        "text_head_w": dense(next(keys), D, c["text_vocab"]).astype(jnp.bfloat16),
        "text_head_b": jnp.zeros((c["text_vocab"],), jnp.float32),
        "speech_head_w": dense(next(keys), D, c["speech_vocab"]).astype(jnp.bfloat16),
        "speech_head_b": jnp.zeros((c["speech_vocab"],), jnp.float32),
    }
    # per-layer weights stacked along a leading (n_layers, ...) axis, bf16.
    wqkv = jnp.stack([dense(next(keys), D, 3 * D) for _ in range(nL)], 0)
    wo = jnp.stack([dense(next(keys), D, D) for _ in range(nL)], 0)
    w1 = jnp.stack([dense(next(keys), D, Dm) for _ in range(nL)], 0)
    w2 = jnp.stack([dense(next(keys), Dm, D) for _ in range(nL)], 0)
    ln1 = jnp.ones((nL, D), jnp.float32)
    ln2 = jnp.ones((nL, D), jnp.float32)
    b2 = jnp.zeros((nL, D), jnp.float32)
    b1 = jnp.zeros((nL, Dm), jnp.float32)
    p["stacked"] = {
        "wqkv": wqkv.astype(jnp.bfloat16),
        "wo": wo.astype(jnp.bfloat16),
        "w1": w1.astype(jnp.bfloat16),
        "w2": w2.astype(jnp.bfloat16),
        "vec_d": jnp.stack([ln1, ln2, b2], axis=1),    # (nL, 3, D)
        "vec_m": b1[:, None, :],                       # (nL, 1, Dm)
    }
    return p


def t3_loss(params, text_tokens, text_token_lens, speech_tokens,
            speech_token_lens, speaker_emb, cond_prompt_speech_tokens,
            emotion_adv, labels_text=None, labels_speech=None):
    c = CFG
    B, Tt = text_tokens.shape
    _, Ts = speech_tokens.shape
    D = c["hidden"]

    # --- conditioning embeddings (T3Cond); tiny projections stay in XLA glue --
    spk = (speaker_emb @ params["spk_w"] + params["spk_b"])[:, None, :]
    prompt = jnp.take(params["speech_emb"], cond_prompt_speech_tokens, axis=0)
    emo = (emotion_adv.reshape(B, 1) @ params["emo_w"]
           + params["emo_b"])[:, None, :]
    cond = jnp.concatenate([spk, prompt, emo], axis=1)        # (B, Lc, D)
    Lc = cond.shape[1]

    # --- token embeddings -----------------------------------------------------
    text_e = jnp.take(params["text_emb"], text_tokens, axis=0) \
        + params["text_pos"][None, :Tt]
    speech_e = jnp.take(params["speech_emb"], speech_tokens, axis=0) \
        + params["speech_pos"][None, :Ts]
    x = jnp.concatenate([cond, text_e, speech_e], axis=1)     # (B, L, D)

    # pad sequence to a multiple of 8 sublanes; padded rows sit *after* all
    # valid positions, so the causal mask keeps them out of valid outputs.
    L = Lc + Tt + Ts
    Lp = ((L + 7) // 8) * 8
    if Lp != L:
        x = jnp.pad(x, ((0, 0), (0, Lp - L), (0, 0)))

    # --- causal transformer backbone: ONE fused Pallas kernel for all layers --
    x = fused_backbone(x, params["stacked"], H=c["n_heads"], Dh=c["head_dim"])

    text_lat = x[:, Lc:Lc + Tt].reshape(-1, D)
    speech_lat = x[:, Lc + Tt:Lc + Tt + Ts].reshape(-1, D)

    # --- labels (length-masked, ignore_index = -100) --------------------------
    if labels_text is None:
        pos_t = jnp.arange(Tt)[None, :]
        labels_text = jnp.where(pos_t < text_token_lens[:, None],
                                text_tokens, IGNORE_ID)
    if labels_speech is None:
        pos_s = jnp.arange(Ts)[None, :]
        labels_speech = jnp.where(pos_s < speech_token_lens[:, None],
                                  speech_tokens, IGNORE_ID)

    # --- fused final-norm + heads + masked CE + loss combine ------------------
    speech_logits_2d, total_loss = pallas_heads_and_loss(
        params["final_norm"],
        text_lat, labels_text.reshape(-1),
        params["text_head_w"], params["text_head_b"],
        speech_lat, labels_speech.reshape(-1),
        params["speech_head_w"], params["speech_head_b"])
    speech_logits = speech_logits_2d.reshape(B, Ts, c["speech_vocab"])
    return total_loss, speech_logits


def t3_for_finetuning_forward(params, text_tokens, text_token_lens,
                              speech_tokens, speech_token_lens,
                              t3_cond_speaker_emb, t3_cond_prompt_speech_tokens,
                              t3_cond_emotion_adv,
                              labels_text=None, labels_speech=None):
    """Mirror of T3ForFineTuning.forward: returns (total_loss, speech_logits)."""
    total_loss, speech_logits = t3_loss(
        params, text_tokens, text_token_lens, speech_tokens, speech_token_lens,
        t3_cond_speaker_emb, t3_cond_prompt_speech_tokens, t3_cond_emotion_adv,
        labels_text, labels_speech)
    return total_loss, speech_logits


# ----------------------------------------------------------------------------
if __name__ == "__main__":
    key = jax.random.PRNGKey(0)
    k_params, k1, k2, k3, k4, k5 = jax.random.split(key, 6)
    params = init_params(k_params)

    B, Tt, Ts = 2, 8, 16
    text_tokens = jax.random.randint(k1, (B, Tt), 0, CFG["text_vocab"], jnp.int32)
    speech_tokens = jax.random.randint(k2, (B, Ts), 0, CFG["speech_vocab"], jnp.int32)
    text_token_lens = jnp.array([Tt, 5], jnp.int32)
    speech_token_lens = jnp.array([Ts, 10], jnp.int32)
    speaker_emb = jax.random.normal(k3, (B, CFG["speaker_emb_dim"]), jnp.float32)
    cond_prompt_speech_tokens = jax.random.randint(
        k4, (B, CFG["speech_cond_prompt_len"]), 0, CFG["speech_vocab"], jnp.int32)
    emotion_adv = jax.random.uniform(k5, (B, 1, 1), jnp.float32)

    total_loss, speech_logits = jax.jit(t3_for_finetuning_forward)(
        params, text_tokens, text_token_lens, speech_tokens, speech_token_lens,
        speaker_emb, cond_prompt_speech_tokens, emotion_adv)

    jax.block_until_ready(total_loss)
    jax.block_until_ready(speech_logits)
    assert speech_logits.shape == (B, Ts, CFG["speech_vocab"])
    assert jnp.isfinite(total_loss)
    print("KERNEL_OK")
</pallas_src>

<mosaic_0001>
module attributes {stable_mosaic.version = 11 : i64} {
  func.func @_layers_kernel(%arg0: i32, %arg1: i32, %arg2: memref<1x32x64xf32, #tpu.memory_space<vmem>>, %arg3: memref<1x3x64xf32, #tpu.memory_space<vmem>>, %arg4: memref<1x1x256xf32, #tpu.memory_space<vmem>>, %arg5: memref<1x64x192xbf16, #tpu.memory_space<vmem>>, %arg6: memref<1x64x64xbf16, #tpu.memory_space<vmem>>, %arg7: memref<1x64x256xbf16, #tpu.memory_space<vmem>>, %arg8: memref<1x256x64xbf16, #tpu.memory_space<vmem>>, %arg9: memref<1x32x64xf32, #tpu.memory_space<vmem>>, %arg10: memref<32x64xf32, #tpu.memory_space<vmem>>) attributes {dimension_semantics = [#tpu.dimension_semantics<parallel>, #tpu.dimension_semantics<arbitrary>], iteration_bounds = array<i64: 2, 2>, scalar_prefetch = 0 : i64, scratch_operands = 1 : i64, tpu.core_type = #tpu.core_type<tc>, window_params = [{transform_indices = @transform_0, window_bounds = array<i64: 1, 32, 64>}, {transform_indices = @transform_1, window_bounds = array<i64: 1, 3, 64>}, {transform_indices = @transform_2, window_bounds = array<i64: 1, 1, 256>}, {transform_indices = @transform_3, window_bounds = array<i64: 1, 64, 192>}, {transform_indices = @transform_4, window_bounds = array<i64: 1, 64, 64>}, {transform_indices = @transform_5, window_bounds = array<i64: 1, 64, 256>}, {transform_indices = @transform_6, window_bounds = array<i64: 1, 256, 64>}, {transform_indices = @transform_7, window_bounds = array<i64: 1, 32, 64>}]} {
    %c0_i32 = arith.constant 0 : i32
    %0 = arith.cmpi eq, %arg1, %c0_i32 : i32
    %1 = arith.extui %0 : i1 to i32
    %c0_i32_0 = arith.constant 0 : i32
    %2 = arith.cmpi ne, %1, %c0_i32_0 : i32
    scf.if %2 {
      %c0_51 = arith.constant 0 : index
      %c0_52 = arith.constant 0 : index
      %c0_53 = arith.constant 0 : index
      %114 = vector.load %arg2[%c0_51, %c0_52, %c0_53] : memref<1x32x64xf32, #tpu.memory_space<vmem>>, vector<1x32x64xf32>
      %115 = vector.shape_cast %114 : vector<1x32x64xf32> to vector<32x64xf32>
      %c0_54 = arith.constant 0 : index
      %c0_55 = arith.constant 0 : index
      %c0_56 = arith.constant 0 : index
      %116 = vector.load %arg9[%c0_54, %c0_55, %c0_56] : memref<1x32x64xf32, #tpu.memory_space<vmem>>, vector<1x32x64xf32>
      %117 = vector.shape_cast %116 : vector<1x32x64xf32> to vector<32x64xf32>
      %118 = vector.shape_cast %115 : vector<32x64xf32> to vector<1x32x64xf32>
      tpu.vector_store %arg9[%c0_54, %c0_55, %c0_56], %118 {strides = array<i32>} : memref<1x32x64xf32, #tpu.memory_space<vmem>>, vector<1x32x64xf32>,
    } else {
    }
    %c0 = arith.constant 0 : index
    %c0_1 = arith.constant 0 : index
    %c0_2 = arith.constant 0 : index
    %3 = vector.load %arg9[%c0, %c0_1, %c0_2] : memref<1x32x64xf32, #tpu.memory_space<vmem>>, vector<1x32x64xf32>
    %4 = vector.shape_cast %3 : vector<1x32x64xf32> to vector<32x64xf32>
    %c0_3 = arith.constant 0 : index
    %c0_4 = arith.constant 0 : index
    %c0_5 = arith.constant 0 : index
    %5 = vector.load %arg3[%c0_3, %c0_4, %c0_5] : memref<1x3x64xf32, #tpu.memory_space<vmem>>, vector<1x3x64xf32>
    %6 = vector.shape_cast %5 : vector<1x3x64xf32> to vector<3x64xf32>
    %7 = vector.extract_strided_slice %6 {offsets = [0, 0], sizes = [1, 64], strides = [1, 1]} : vector<3x64xf32> to vector<1x64xf32>
    %8 = vector.extract_strided_slice %6 {offsets = [1, 0], sizes = [1, 64], strides = [1, 1]} : vector<3x64xf32> to vector<1x64xf32>
    %9 = vector.extract_strided_slice %6 {offsets = [2, 0], sizes = [1, 64], strides = [1, 1]} : vector<3x64xf32> to vector<1x64xf32>
    %c0_6 = arith.constant 0 : index
    %c0_7 = arith.constant 0 : index
    %c0_8 = arith.constant 0 : index
    %10 = vector.load %arg4[%c0_6, %c0_7, %c0_8] : memref<1x1x256xf32, #tpu.memory_space<vmem>>, vector<1x1x256xf32>
    %11 = vector.shape_cast %10 : vector<1x1x256xf32> to vector<1x256xf32>
    %12 = arith.mulf %4, %4 : vector<32x64xf32>
    %cst = arith.constant dense<0.000000e+00> : vector<32xf32>
    %13 = vector.multi_reduction <add>, %12, %cst [1] : vector<32x64xf32> to vector<32xf32>
    %14 = vector.shape_cast %13 : vector<32xf32> to vector<32x1xf32>
    %cst_9 = arith.constant 6.400000e+01 : f32
    %15 = vector.broadcast %cst_9 : f32 to vector<32x1xf32>
    %16 = arith.divf %14, %15 : vector<32x1xf32>
    %cst_10 = arith.constant 9.99999997E-7 : f32
    %17 = vector.broadcast %cst_10 : f32 to vector<32x1xf32>
    %18 = arith.addf %16, %17 : vector<32x1xf32>
    %19 = math.rsqrt %18 : vector<32x1xf32>
    %20 = vector.broadcast %19 : vector<32x1xf32> to vector<32x64xf32>
    %21 = arith.mulf %4, %20 : vector<32x64xf32>
    %22 = vector.broadcast %7 : vector<1x64xf32> to vector<32x64xf32>
    %23 = arith.mulf %21, %22 : vector<32x64xf32>
    %24 = arith.truncf %23 : vector<32x64xf32> to vector<32x64xbf16>
    %c0_11 = arith.constant 0 : index
    %c0_12 = arith.constant 0 : index
    %c0_13 = arith.constant 0 : index
    %25 = vector.load %arg5[%c0_11, %c0_12, %c0_13] : memref<1x64x192xbf16, #tpu.memory_space<vmem>>, vector<1x64x192xbf16>
    %26 = vector.shape_cast %25 : vector<1x64x192xbf16> to vector<64x192xbf16>
    %cst_14 = arith.constant dense<0.000000e+00> : vector<32x192xf32>
    %27 = tpu.matmul %24, %26, %cst_14 {dimension_numbers = #tpu.dot_dimension_numbers<[1], [0], [0], [1], [0, 0, 1, 1], [], []>} : vector<32x64xbf16>, vector<64x192xbf16>, vector<32x192xf32> -> vector<32x192xf32>
    %28 = arith.truncf %27 : vector<32x192xf32> to vector<32x192xbf16>
    %29 = tpu.iota {dimensions = array<i32: 0>} : vector<32x32xi32>
    %30 = tpu.iota {dimensions = array<i32: 1>} : vector<32x32xi32>
    %31 = arith.cmpi sle, %30, %29 : vector<32x32xi32>
    %32 = vector.extract_strided_slice %28 {offsets = [0, 0], sizes = [32, 32], strides = [1, 1]} : vector<32x192xbf16> to vector<32x32xbf16>
    %33 = vector.extract_strided_slice %28 {offsets = [0, 64], sizes = [32, 32], strides = [1, 1]} : vector<32x192xbf16> to vector<32x32xbf16>
    %34 = vector.extract_strided_slice %28 {offsets = [0, 128], sizes = [32, 32], strides = [1, 1]} : vector<32x192xbf16> to vector<32x32xbf16>
    %cst_15 = arith.constant dense<0.000000e+00> : vector<32x32xf32>
    %35 = tpu.matmul %32, %33, %cst_15 {dimension_numbers = #tpu.dot_dimension_numbers<[1], [1], [0], [0], [0, 0, 1, 0], [], []>} : vector<32x32xbf16>, vector<32x32xbf16>, vector<32x32xf32> -> vector<32x32xf32>
    %cst_16 = arith.constant 0.176776692 : f32
    %36 = vector.broadcast %cst_16 : f32 to vector<32x32xf32>
    %37 = arith.mulf %35, %36 : vector<32x32xf32>
    %cst_17 = arith.constant -1.000000e+30 : f32
    %38 = vector.broadcast %cst_17 : f32 to vector<32x32xf32>
    %39 = arith.select %31, %37, %38 : vector<32x32xi1>, vector<32x32xf32>
    %cst_18 = arith.constant dense<0xFF800000> : vector<32xf32>
    %40 = vector.multi_reduction <maximumf>, %39, %cst_18 [1] : vector<32x32xf32> to vector<32xf32>
    %41 = vector.shape_cast %40 : vector<32xf32> to vector<32x1xf32>
    %42 = vector.broadcast %41 : vector<32x1xf32> to vector<32x32xf32>
    %43 = arith.subf %39, %42 : vector<32x32xf32>
    %44 = math.exp %43 : vector<32x32xf32>
    %cst_19 = arith.constant dense<0.000000e+00> : vector<32xf32>
    %45 = vector.multi_reduction <add>, %44, %cst_19 [1] : vector<32x32xf32> to vector<32xf32>
    %46 = vector.shape_cast %45 : vector<32xf32> to vector<32x1xf32>
    %47 = arith.truncf %44 : vector<32x32xf32> to vector<32x32xbf16>
    %cst_20 = arith.constant dense<0.000000e+00> : vector<32x32xf32>
    %48 = tpu.matmul %47, %34, %cst_20 {dimension_numbers = #tpu.dot_dimension_numbers<[1], [0], [0], [1], [0, 0, 1, 1], [], []>} : vector<32x32xbf16>, vector<32x32xbf16>, vector<32x32xf32> -> vector<32x32xf32>
    %49 = tpu.reciprocal %46 {approx = true} : vector<32x1xf32> -> vector<32x1xf32>
    %50 = vector.broadcast %49 : vector<32x1xf32> to vector<32x32xf32>
    %51 = arith.mulf %48, %50 : vector<32x32xf32>
    %c0_21 = arith.constant 0 : index
    %c0_22 = arith.constant 0 : index
    %52 = vector.load %arg10[%c0_21, %c0_22] : memref<32x64xf32, #tpu.memory_space<vmem>>, vector<32x32xf32>
    tpu.vector_store %arg10[%c0_21, %c0_22], %51 {strides = array<i32>} : memref<32x64xf32, #tpu.memory_space<vmem>>, vector<32x32xf32>,
    %53 = vector.extract_strided_slice %28 {offsets = [0, 32], sizes = [32, 32], strides = [1, 1]} : vector<32x192xbf16> to vector<32x32xbf16>
    %54 = vector.extract_strided_slice %28 {offsets = [0, 96], sizes = [32, 32], strides = [1, 1]} : vector<32x192xbf16> to vector<32x32xbf16>
    %55 = vector.extract_strided_slice %28 {offsets = [0, 160], sizes = [32, 32], strides = [1, 1]} : vector<32x192xbf16> to vector<32x32xbf16>
    %cst_23 = arith.constant dense<0.000000e+00> : vector<32x32xf32>
    %56 = tpu.matmul %53, %54, %cst_23 {dimension_numbers = #tpu.dot_dimension_numbers<[1], [1], [0], [0], [0, 0, 1, 0], [], []>} : vector<32x32xbf16>, vector<32x32xbf16>, vector<32x32xf32> -> vector<32x32xf32>
    %cst_24 = arith.constant 0.176776692 : f32
    %57 = vector.broadcast %cst_24 : f32 to vector<32x32xf32>
    %58 = arith.mulf %56, %57 : vector<32x32xf32>
    %cst_25 = arith.constant -1.000000e+30 : f32
    %59 = vector.broadcast %cst_25 : f32 to vector<32x32xf32>
    %60 = arith.select %31, %58, %59 : vector<32x32xi1>, vector<32x32xf32>
    %cst_26 = arith.constant dense<0xFF800000> : vector<32xf32>
    %61 = vector.multi_reduction <maximumf>, %60, %cst_26 [1] : vector<32x32xf32> to vector<32xf32>
    %62 = vector.shape_cast %61 : vector<32xf32> to vector<32x1xf32>
    %63 = vector.broadcast %62 : vector<32x1xf32> to vector<32x32xf32>
    %64 = arith.subf %60, %63 : vector<32x32xf32>
    %65 = math.exp %64 : vector<32x32xf32>
    %cst_27 = arith.constant dense<0.000000e+00> : vector<32xf32>
    %66 = vector.multi_reduction <add>, %65, %cst_27 [1] : vector<32x32xf32> to vector<32xf32>
    %67 = vector.shape_cast %66 : vector<32xf32> to vector<32x1xf32>
    %68 = arith.truncf %65 : vector<32x32xf32> to vector<32x32xbf16>
    %cst_28 = arith.constant dense<0.000000e+00> : vector<32x32xf32>
    %69 = tpu.matmul %68, %55, %cst_28 {dimension_numbers = #tpu.dot_dimension_numbers<[1], [0], [0], [1], [0, 0, 1, 1], [], []>} : vector<32x32xbf16>, vector<32x32xbf16>, vector<32x32xf32> -> vector<32x32xf32>
    %70 = tpu.reciprocal %67 {approx = true} : vector<32x1xf32> -> vector<32x1xf32>
    %71 = vector.broadcast %70 : vector<32x1xf32> to vector<32x32xf32>
    %72 = arith.mulf %69, %71 : vector<32x32xf32>
    %c0_29 = arith.constant 0 : index
    %c32 = arith.constant 32 : index
    %73 = vector.load %arg10[%c0_29, %c32] : memref<32x64xf32, #tpu.memory_space<vmem>>, vector<32x32xf32>
    tpu.vector_store %arg10[%c0_29, %c32], %72 {strides = array<i32>} : memref<32x64xf32, #tpu.memory_space<vmem>>, vector<32x32xf32>,
    %c0_30 = arith.constant 0 : index
    %c0_31 = arith.constant 0 : index
    %74 = vector.load %arg10[%c0_30, %c0_31] : memref<32x64xf32, #tpu.memory_space<vmem>>, vector<32x64xf32>
    %75 = arith.truncf %74 : vector<32x64xf32> to vector<32x64xbf16>
    %c0_32 = arith.constant 0 : index
    %c0_33 = arith.constant 0 : index
    %c0_34 = arith.constant 0 : index
    %76 = vector.load %arg6[%c0_32, %c0_33, %c0_34] : memref<1x64x64xbf16, #tpu.memory_space<vmem>>, vector<1x64x64xbf16>
    %77 = vector.shape_cast %76 : vector<1x64x64xbf16> to vector<64x64xbf16>
    %cst_35 = arith.constant dense<0.000000e+00> : vector<32x64xf32>
    %78 = tpu.matmul %75, %77, %cst_35 {dimension_numbers = #tpu.dot_dimension_numbers<[1], [0], [0], [1], [0, 0, 1, 1], [], []>} : vector<32x64xbf16>, vector<64x64xbf16>, vector<32x64xf32> -> vector<32x64xf32>
    %79 = arith.addf %4, %78 : vector<32x64xf32>
    %80 = arith.mulf %79, %79 : vector<32x64xf32>
    %cst_36 = arith.constant dense<0.000000e+00> : vector<32xf32>
    %81 = vector.multi_reduction <add>, %80, %cst_36 [1] : vector<32x64xf32> to vector<32xf32>
    %82 = vector.shape_cast %81 : vector<32xf32> to vector<32x1xf32>
    %cst_37 = arith.constant 6.400000e+01 : f32
    %83 = vector.broadcast %cst_37 : f32 to vector<32x1xf32>
    %84 = arith.divf %82, %83 : vector<32x1xf32>
    %cst_38 = arith.constant 9.99999997E-7 : f32
    %85 = vector.broadcast %cst_38 : f32 to vector<32x1xf32>
    %86 = arith.addf %84, %85 : vector<32x1xf32>
    %87 = math.rsqrt %86 : vector<32x1xf32>
    %88 = vector.broadcast %87 : vector<32x1xf32> to vector<32x64xf32>
    %89 = arith.mulf %79, %88 : vector<32x64xf32>
    %90 = vector.broadcast %8 : vector<1x64xf32> to vector<32x64xf32>
    %91 = arith.mulf %89, %90 : vector<32x64xf32>
    %92 = arith.truncf %91 : vector<32x64xf32> to vector<32x64xbf16>
    %c0_39 = arith.constant 0 : index
    %c0_40 = arith.constant 0 : index
    %c0_41 = arith.constant 0 : index
    %93 = vector.load %arg7[%c0_39, %c0_40, %c0_41] : memref<1x64x256xbf16, #tpu.memory_space<vmem>>, vector<1x64x256xbf16>
    %94 = vector.shape_cast %93 : vector<1x64x256xbf16> to vector<64x256xbf16>
    %cst_42 = arith.constant dense<0.000000e+00> : vector<32x256xf32>
    %95 = tpu.matmul %92, %94, %cst_42 {dimension_numbers = #tpu.dot_dimension_numbers<[1], [0], [0], [1], [0, 0, 1, 1], [], []>} : vector<32x64xbf16>, vector<64x256xbf16>, vector<32x256xf32> -> vector<32x256xf32>
    %96 = vector.broadcast %11 : vector<1x256xf32> to vector<32x256xf32>
    %97 = arith.addf %95, %96 : vector<32x256xf32>
    %98 = arith.negf %97 : vector<32x256xf32>
    %99 = math.exp %98 : vector<32x256xf32>
    %cst_43 = arith.constant 1.000000e+00 : f32
    %100 = vector.broadcast %cst_43 : f32 to vector<32x256xf32>
    %101 = arith.addf %100, %99 : vector<32x256xf32>
    %102 = arith.divf %100, %101 : vector<32x256xf32>
    %103 = arith.mulf %97, %102 : vector<32x256xf32>
    %104 = arith.truncf %103 : vector<32x256xf32> to vector<32x256xbf16>
    %c0_44 = arith.constant 0 : index
    %c0_45 = arith.constant 0 : index
    %c0_46 = arith.constant 0 : index
    %105 = vector.load %arg8[%c0_44, %c0_45, %c0_46] : memref<1x256x64xbf16, #tpu.memory_space<vmem>>, vector<1x256x64xbf16>
    %106 = vector.shape_cast %105 : vector<1x256x64xbf16> to vector<256x64xbf16>
    %cst_47 = arith.constant dense<0.000000e+00> : vector<32x64xf32>
    %107 = tpu.matmul %104, %106, %cst_47 {dimension_numbers = #tpu.dot_dimension_numbers<[1], [0], [0], [1], [0, 0, 1, 1], [], []>} : vector<32x256xbf16>, vector<256x64xbf16>, vector<32x64xf32> -> vector<32x64xf32>
    %108 = arith.addf %79, %107 : vector<32x64xf32>
    %109 = vector.broadcast %9 : vector<1x64xf32> to vector<32x64xf32>
    %110 = arith.addf %108, %109 : vector<32x64xf32>
    %c0_48 = arith.constant 0 : index
    %c0_49 = arith.constant 0 : index
    %c0_50 = arith.constant 0 : index
    %111 = vector.load %arg9[%c0_48, %c0_49, %c0_50] : memref<1x32x64xf32, #tpu.memory_space<vmem>>, vector<1x32x64xf32>
    %112 = vector.shape_cast %111 : vector<1x32x64xf32> to vector<32x64xf32>
    %113 = vector.shape_cast %110 : vector<32x64xf32> to vector<1x32x64xf32>
    tpu.vector_store %arg9[%c0_48, %c0_49, %c0_50], %113 {strides = array<i32>} : memref<1x32x64xf32, #tpu.memory_space<vmem>>, vector<1x32x64xf32>,
    return
  }
  func.func @transform_0(%arg0: i32, %arg1: i32) -> (i32, i32, i32) {
    %c0_i32 = arith.constant 0 : i32
    %c0_i32_0 = arith.constant 0 : i32
    %c0_i32_1 = arith.constant 0 : i32
    return %arg0, %c0_i32, %c0_i32_0 : i32, i32, i32
  }
  func.func @transform_1(%arg0: i32, %arg1: i32) -> (i32, i32, i32) {
    %c0_i32 = arith.constant 0 : i32
    %c0_i32_0 = arith.constant 0 : i32
    %c0_i32_1 = arith.constant 0 : i32
    return %arg1, %c0_i32, %c0_i32_0 : i32, i32, i32
  }
  func.func @transform_2(%arg0: i32, %arg1: i32) -> (i32, i32, i32) {
    %c0_i32 = arith.constant 0 : i32
    %c0_i32_0 = arith.constant 0 : i32
    %c0_i32_1 = arith.constant 0 : i32
    return %arg1, %c0_i32, %c0_i32_0 : i32, i32, i32
  }
  func.func @transform_3(%arg0: i32, %arg1: i32) -> (i32, i32, i32) {
    %c0_i32 = arith.constant 0 : i32
    %c0_i32_0 = arith.constant 0 : i32
    %c0_i32_1 = arith.constant 0 : i32
    return %arg1, %c0_i32, %c0_i32_0 : i32, i32, i32
  }
  func.func @transform_4(%arg0: i32, %arg1: i32) -> (i32, i32, i32) {
    %c0_i32 = arith.constant 0 : i32
    %c0_i32_0 = arith.constant 0 : i32
    %c0_i32_1 = arith.constant 0 : i32
    return %arg1, %c0_i32, %c0_i32_0 : i32, i32, i32
  }
  func.func @transform_5(%arg0: i32, %arg1: i32) -> (i32, i32, i32) {
    %c0_i32 = arith.constant 0 : i32
    %c0_i32_0 = arith.constant 0 : i32
    %c0_i32_1 = arith.constant 0 : i32
    return %arg1, %c0_i32, %c0_i32_0 : i32, i32, i32
  }
  func.func @transform_6(%arg0: i32, %arg1: i32) -> (i32, i32, i32) {
    %c0_i32 = arith.constant 0 : i32
    %c0_i32_0 = arith.constant 0 : i32
    %c0_i32_1 = arith.constant 0 : i32
    return %arg1, %c0_i32, %c0_i32_0 : i32, i32, i32
  }
  func.func @transform_7(%arg0: i32, %arg1: i32) -> (i32, i32, i32) {
    %c0_i32 = arith.constant 0 : i32
    %c0_i32_0 = arith.constant 0 : i32
    %c0_i32_1 = arith.constant 0 : i32
    return %arg0, %c0_i32, %c0_i32_0 : i32, i32, i32
  }
}

module attributes {stable_mosaic.version = 11 : i64} {
  func.func @_heads_ce_kernel(%arg0: i32, %arg1: memref<1x64xf32, #tpu.memory_space<vmem>>, %arg2: memref<16x64xf32, #tpu.memory_space<vmem>>, %arg3: memref<16x1xi32, #tpu.memory_space<vmem>>, %arg4: memref<64x256xbf16, #tpu.memory_space<vmem>>, %arg5: memref<1x256xf32, #tpu.memory_space<vmem>>, %arg6: memref<32x64xf32, #tpu.memory_space<vmem>>, %arg7: memref<32x1xi32, #tpu.memory_space<vmem>>, %arg8: memref<64x512xbf16, #tpu.memory_space<vmem>>, %arg9: memref<1x512xf32, #tpu.memory_space<vmem>>, %arg10: memref<32x512xf32, #tpu.memory_space<vmem>>, %arg11: memref<1x1xf32, #tpu.memory_space<vmem>>) attributes {dimension_semantics = [#tpu.dimension_semantics<arbitrary>], iteration_bounds = array<i64: 1>, scalar_prefetch = 0 : i64, scratch_operands = 0 : i64, tpu.core_type = #tpu.core_type<tc>, window_params = [{pipeline_mode = #tpu.pipeline_mode<synchronous>, transform_indices = @transform_0, window_bounds = array<i64: 1, 64>}, {pipeline_mode = #tpu.pipeline_mode<synchronous>, transform_indices = @transform_1, window_bounds = array<i64: 16, 64>}, {pipeline_mode = #tpu.pipeline_mode<synchronous>, transform_indices = @transform_2, window_bounds = array<i64: 16, 1>}, {pipeline_mode = #tpu.pipeline_mode<synchronous>, transform_indices = @transform_3, window_bounds = array<i64: 64, 256>}, {pipeline_mode = #tpu.pipeline_mode<synchronous>, transform_indices = @transform_4, window_bounds = array<i64: 1, 256>}, {pipeline_mode = #tpu.pipeline_mode<synchronous>, transform_indices = @transform_5, window_bounds = array<i64: 32, 64>}, {pipeline_mode = #tpu.pipeline_mode<synchronous>, transform_indices = @transform_6, window_bounds = array<i64: 32, 1>}, {pipeline_mode = #tpu.pipeline_mode<synchronous>, transform_indices = @transform_7, window_bounds = array<i64: 64, 512>}, {pipeline_mode = #tpu.pipeline_mode<synchronous>, transform_indices = @transform_8, window_bounds = array<i64: 1, 512>}, {pipeline_mode = #tpu.pipeline_mode<synchronous>, transform_indices = @transform_9, window_bounds = array<i64: 32, 512>}, {pipeline_mode = #tpu.pipeline_mode<synchronous>, transform_indices = @transform_10, window_bounds = array<i64: 1, 1>}]} {
    %c0 = arith.constant 0 : index
    %c0_0 = arith.constant 0 : index
    %0 = vector.load %arg1[%c0, %c0_0] : memref<1x64xf32, #tpu.memory_space<vmem>>, vector<1x64xf32>
    %c0_1 = arith.constant 0 : index
    %c0_2 = arith.constant 0 : index
    %1 = vector.load %arg2[%c0_1, %c0_2] : memref<16x64xf32, #tpu.memory_space<vmem>>, vector<16x64xf32>
    %2 = arith.mulf %1, %1 : vector<16x64xf32>
    %cst = arith.constant dense<0.000000e+00> : vector<16xf32>
    %3 = vector.multi_reduction <add>, %2, %cst [1] : vector<16x64xf32> to vector<16xf32>
    %4 = vector.shape_cast %3 : vector<16xf32> to vector<16x1xf32>
    %cst_3 = arith.constant 6.400000e+01 : f32
    %5 = vector.broadcast %cst_3 : f32 to vector<16x1xf32>
    %6 = arith.divf %4, %5 : vector<16x1xf32>
    %cst_4 = arith.constant 9.99999997E-7 : f32
    %7 = vector.broadcast %cst_4 : f32 to vector<16x1xf32>
    %8 = arith.addf %6, %7 : vector<16x1xf32>
    %9 = math.rsqrt %8 : vector<16x1xf32>
    %10 = vector.broadcast %9 : vector<16x1xf32> to vector<16x64xf32>
    %11 = arith.mulf %1, %10 : vector<16x64xf32>
    %12 = vector.broadcast %0 : vector<1x64xf32> to vector<16x64xf32>
    %13 = arith.mulf %11, %12 : vector<16x64xf32>
    %14 = arith.truncf %13 : vector<16x64xf32> to vector<16x64xbf16>
    %c0_5 = arith.constant 0 : index
    %c0_6 = arith.constant 0 : index
    %15 = vector.load %arg4[%c0_5, %c0_6] : memref<64x256xbf16, #tpu.memory_space<vmem>>, vector<64x256xbf16>
    %cst_7 = arith.constant dense<0.000000e+00> : vector<16x256xf32>
    %16 = tpu.matmul %14, %15, %cst_7 {dimension_numbers = #tpu.dot_dimension_numbers<[1], [0], [0], [1], [0, 0, 1, 1], [], []>} : vector<16x64xbf16>, vector<64x256xbf16>, vector<16x256xf32> -> vector<16x256xf32>
    %c0_8 = arith.constant 0 : index
    %c0_9 = arith.constant 0 : index
    %17 = vector.load %arg5[%c0_8, %c0_9] : memref<1x256xf32, #tpu.memory_space<vmem>>, vector<1x256xf32>
    %18 = vector.broadcast %17 : vector<1x256xf32> to vector<16x256xf32>
    %19 = arith.addf %16, %18 : vector<16x256xf32>
    %c0_10 = arith.constant 0 : index
    %c0_11 = arith.constant 0 : index
    %20 = vector.load %arg3[%c0_10, %c0_11] : memref<16x1xi32, #tpu.memory_space<vmem>>, vector<16x1xi32>
    %cst_12 = arith.constant dense<0xFF800000> : vector<16xf32>
    %21 = vector.multi_reduction <maximumf>, %19, %cst_12 [1] : vector<16x256xf32> to vector<16xf32>
    %22 = vector.shape_cast %21 : vector<16xf32> to vector<16x1xf32>
    %23 = vector.broadcast %22 : vector<16x1xf32> to vector<16x256xf32>
    %24 = arith.subf %19, %23 : vector<16x256xf32>
    %25 = math.exp %24 : vector<16x256xf32>
    %cst_13 = arith.constant dense<0.000000e+00> : vector<16xf32>
    %26 = vector.multi_reduction <add>, %25, %cst_13 [1] : vector<16x256xf32> to vector<16xf32>
    %27 = vector.shape_cast %26 : vector<16xf32> to vector<16x1xf32>
    %28 = math.log %27 : vector<16x1xf32>
    %29 = vector.broadcast %28 : vector<16x1xf32> to vector<16x256xf32>
    %30 = arith.subf %24, %29 : vector<16x256xf32>
    %31 = tpu.iota {dimensions = array<i32: 1>} : vector<16x256xi32>
    %c-100_i32 = arith.constant -100 : i32
    %32 = vector.broadcast %c-100_i32 : i32 to vector<16x1xi32>
    %33 = arith.cmpi ne, %20, %32 : vector<16x1xi32>
    %34 = vector.broadcast %20 : vector<16x1xi32> to vector<16x256xi32>
    %35 = arith.cmpi eq, %31, %34 : vector<16x256xi32>
    %36 = vector.broadcast %33 : vector<16x1xi1> to vector<16x256xi1>
    %37 = arith.andi %35, %36 : vector<16x256xi1>
    %cst_14 = arith.constant 0.000000e+00 : f32
    %38 = vector.broadcast %cst_14 : f32 to vector<16x256xf32>
    %39 = arith.select %37, %30, %38 : vector<16x256xi1>, vector<16x256xf32>
    %40 = vector.shape_cast %39 : vector<16x256xf32> to vector<1x16x256xf32>
    %cst_15 = arith.constant dense<0.000000e+00> : vector<1xf32>
    %41 = vector.multi_reduction <add>, %40, %cst_15 [1, 2] : vector<1x16x256xf32> to vector<1xf32>
    %42 = vector.shape_cast %41 : vector<1xf32> to vector<1x1x1xf32>
    %43 = vector.extract %42[0, 0, 0] : f32 from vector<1x1x1xf32>
    %44 = vector.broadcast %43 : f32 to vector<1x1xf32>
    %cst_16 = arith.constant 0.000000e+00 : f32
    %45 = vector.broadcast %cst_16 : f32 to vector<1x1xf32>
    %46 = arith.subf %45, %44 : vector<1x1xf32>
    %47 = arith.extui %33 : vector<16x1xi1> to vector<16x1xi32>
    %48 = arith.sitofp %47 : vector<16x1xi32> to vector<16x1xf32>
    %49 = vector.shape_cast %48 : vector<16x1xf32> to vector<1x16x1xf32>
    %cst_17 = arith.constant dense<0.000000e+00> : vector<1xf32>
    %50 = vector.multi_reduction <add>, %49, %cst_17 [1, 2] : vector<1x16x1xf32> to vector<1xf32>
    %51 = vector.shape_cast %50 : vector<1xf32> to vector<1x1x1xf32>
    %52 = vector.extract %51[0, 0, 0] : f32 from vector<1x1x1xf32>
    %53 = vector.broadcast %52 : f32 to vector<1x1xf32>
    %c0_18 = arith.constant 0 : index
    %c0_19 = arith.constant 0 : index
    %54 = vector.load %arg6[%c0_18, %c0_19] : memref<32x64xf32, #tpu.memory_space<vmem>>, vector<32x64xf32>
    %55 = arith.mulf %54, %54 : vector<32x64xf32>
    %cst_20 = arith.constant dense<0.000000e+00> : vector<32xf32>
    %56 = vector.multi_reduction <add>, %55, %cst_20 [1] : vector<32x64xf32> to vector<32xf32>
    %57 = vector.shape_cast %56 : vector<32xf32> to vector<32x1xf32>
    %cst_21 = arith.constant 6.400000e+01 : f32
    %58 = vector.broadcast %cst_21 : f32 to vector<32x1xf32>
    %59 = arith.divf %57, %58 : vector<32x1xf32>
    %cst_22 = arith.constant 9.99999997E-7 : f32
    %60 = vector.broadcast %cst_22 : f32 to vector<32x1xf32>
    %61 = arith.addf %59, %60 : vector<32x1xf32>
    %62 = math.rsqrt %61 : vector<32x1xf32>
    %63 = vector.broadcast %62 : vector<32x1xf32> to vector<32x64xf32>
    %64 = arith.mulf %54, %63 : vector<32x64xf32>
    %65 = vector.broadcast %0 : vector<1x64xf32> to vector<32x64xf32>
    %66 = arith.mulf %64, %65 : vector<32x64xf32>
    %67 = arith.truncf %66 : vector<32x64xf32> to vector<32x64xbf16>
    %c0_23 = arith.constant 0 : index
    %c0_24 = arith.constant 0 : index
    %68 = vector.load %arg8[%c0_23, %c0_24] : memref<64x512xbf16, #tpu.memory_space<vmem>>, vector<64x512xbf16>
    %cst_25 = arith.constant dense<0.000000e+00> : vector<32x512xf32>
    %69 = tpu.matmul %67, %68, %cst_25 {dimension_numbers = #tpu.dot_dimension_numbers<[1], [0], [0], [1], [0, 0, 1, 1], [], []>} : vector<32x64xbf16>, vector<64x512xbf16>, vector<32x512xf32> -> vector<32x512xf32>
    %c0_26 = arith.constant 0 : index
    %c0_27 = arith.constant 0 : index
    %70 = vector.load %arg9[%c0_26, %c0_27] : memref<1x512xf32, #tpu.memory_space<vmem>>, vector<1x512xf32>
    %71 = vector.broadcast %70 : vector<1x512xf32> to vector<32x512xf32>
    %72 = arith.addf %69, %71 : vector<32x512xf32>
    %c0_28 = arith.constant 0 : index
    %c0_29 = arith.constant 0 : index
    %73 = vector.load %arg10[%c0_28, %c0_29] : memref<32x512xf32, #tpu.memory_space<vmem>>, vector<32x512xf32>
    tpu.vector_store %arg10[%c0_28, %c0_29], %72 {strides = array<i32>} : memref<32x512xf32, #tpu.memory_space<vmem>>, vector<32x512xf32>,
    %c0_30 = arith.constant 0 : index
    %c0_31 = arith.constant 0 : index
    %74 = vector.load %arg7[%c0_30, %c0_31] : memref<32x1xi32, #tpu.memory_space<vmem>>, vector<32x1xi32>
    %cst_32 = arith.constant dense<0xFF800000> : vector<32xf32>
    %75 = vector.multi_reduction <maximumf>, %72, %cst_32 [1] : vector<32x512xf32> to vector<32xf32>
    %76 = vector.shape_cast %75 : vector<32xf32> to vector<32x1xf32>
    %77 = vector.broadcast %76 : vector<32x1xf32> to vector<32x512xf32>
    %78 = arith.subf %72, %77 : vector<32x512xf32>
    %79 = math.exp %78 : vector<32x512xf32>
    %cst_33 = arith.constant dense<0.000000e+00> : vector<32xf32>
    %80 = vector.multi_reduction <add>, %79, %cst_33 [1] : vector<32x512xf32> to vector<32xf32>
    %81 = vector.shape_cast %80 : vector<32xf32> to vector<32x1xf32>
    %82 = math.log %81 : vector<32x1xf32>
    %83 = vector.broadcast %82 : vector<32x1xf32> to vector<32x512xf32>
    %84 = arith.subf %78, %83 : vector<32x512xf32>
    %85 = tpu.iota {dimensions = array<i32: 1>} : vector<32x512xi32>
    %c-100_i32_34 = arith.constant -100 : i32
    %86 = vector.broadcast %c-100_i32_34 : i32 to vector<32x1xi32>
    %87 = arith.cmpi ne, %74, %86 : vector<32x1xi32>
    %88 = vector.broadcast %74 : vector<32x1xi32> to vector<32x512xi32>
    %89 = arith.cmpi eq, %85, %88 : vector<32x512xi32>
    %90 = vector.broadcast %87 : vector<32x1xi1> to vector<32x512xi1>
    %91 = arith.andi %89, %90 : vector<32x512xi1>
    %cst_35 = arith.constant 0.000000e+00 : f32
    %92 = vector.broadcast %cst_35 : f32 to vector<32x512xf32>
    %93 = arith.select %91, %84, %92 : vector<32x512xi1>, vector<32x512xf32>
    %94 = vector.shape_cast %93 : vector<32x512xf32> to vector<1x32x512xf32>
    %cst_36 = arith.constant dense<0.000000e+00> : vector<1xf32>
    %95 = vector.multi_reduction <add>, %94, %cst_36 [1, 2] : vector<1x32x512xf32> to vector<1xf32>
    %96 = vector.shape_cast %95 : vector<1xf32> to vector<1x1x1xf32>
    %97 = vector.extract %96[0, 0, 0] : f32 from vector<1x1x1xf32>
    %98 = vector.broadcast %97 : f32 to vector<1x1xf32>
    %cst_37 = arith.constant 0.000000e+00 : f32
    %99 = vector.broadcast %cst_37 : f32 to vector<1x1xf32>
    %100 = arith.subf %99, %98 : vector<1x1xf32>
    %101 = arith.extui %87 : vector<32x1xi1> to vector<32x1xi32>
    %102 = arith.sitofp %101 : vector<32x1xi32> to vector<32x1xf32>
    %103 = vector.shape_cast %102 : vector<32x1xf32> to vector<1x32x1xf32>
    %cst_38 = arith.constant dense<0.000000e+00> : vector<1xf32>
    %104 = vector.multi_reduction <add>, %103, %cst_38 [1, 2] : vector<1x32x1xf32> to vector<1xf32>
    %105 = vector.shape_cast %104 : vector<1xf32> to vector<1x1x1xf32>
    %106 = vector.extract %105[0, 0, 0] : f32 from vector<1x1x1xf32>
    %107 = vector.broadcast %106 : f32 to vector<1x1xf32>
    %cst_39 = arith.constant 1.000000e+00 : f32
    %108 = vector.broadcast %cst_39 : f32 to vector<1x1xf32>
    %109 = arith.maximumf %53, %108 : vector<1x1xf32>
    %110 = arith.divf %46, %109 : vector<1x1xf32>
    %cst_40 = arith.constant 1.000000e+00 : f32
    %111 = vector.broadcast %cst_40 : f32 to vector<1x1xf32>
    %112 = arith.maximumf %107, %111 : vector<1x1xf32>
    %113 = arith.divf %100, %112 : vector<1x1xf32>
    %114 = arith.addf %110, %113 : vector<1x1xf32>
    %c0_41 = arith.constant 0 : index
    %c0_42 = arith.constant 0 : index
    %115 = vector.load %arg11[%c0_41, %c0_42] : memref<1x1xf32, #tpu.memory_space<vmem>>, vector<1x1xf32>
    tpu.vector_store %arg11[%c0_41, %c0_42], %114 {strides = array<i32>} : memref<1x1xf32, #tpu.memory_space<vmem>>, vector<1x1xf32>,
    return
  }
  func.func @transform_0(%arg0: i32) -> (i32, i32) {
    %c0_i32 = arith.constant 0 : i32
    %c0_i32_0 = arith.constant 0 : i32
    %c0_i32_1 = arith.constant 0 : i32
    return %c0_i32, %c0_i32_0 : i32, i32
  }
  func.func @transform_1(%arg0: i32) -> (i32, i32) {
    %c0_i32 = arith.constant 0 : i32
    %c0_i32_0 = arith.constant 0 : i32
    %c0_i32_1 = arith.constant 0 : i32
    return %c0_i32, %c0_i32_0 : i32, i32
  }
  func.func @transform_2(%arg0: i32) -> (i32, i32) {
    %c0_i32 = arith.constant 0 : i32
    %c0_i32_0 = arith.constant 0 : i32
    %c0_i32_1 = arith.constant 0 : i32
    return %c0_i32, %c0_i32_0 : i32, i32
  }
  func.func @transform_3(%arg0: i32) -> (i32, i32) {
    %c0_i32 = arith.constant 0 : i32
    %c0_i32_0 = arith.constant 0 : i32
    %c0_i32_1 = arith.constant 0 : i32
    return %c0_i32, %c0_i32_0 : i32, i32
  }
  func.func @transform_4(%arg0: i32) -> (i32, i32) {
    %c0_i32 = arith.constant 0 : i32
    %c0_i32_0 = arith.constant 0 : i32
    %c0_i32_1 = arith.constant 0 : i32
    return %c0_i32, %c0_i32_0 : i32, i32
  }
  func.func @transform_5(%arg0: i32) -> (i32, i32) {
    %c0_i32 = arith.constant 0 : i32
    %c0_i32_0 = arith.constant 0 : i32
    %c0_i32_1 = arith.constant 0 : i32
    return %c0_i32, %c0_i32_0 : i32, i32
  }
  func.func @transform_6(%arg0: i32) -> (i32, i32) {
    %c0_i32 = arith.constant 0 : i32
    %c0_i32_0 = arith.constant 0 : i32
    %c0_i32_1 = arith.constant 0 : i32
    return %c0_i32, %c0_i32_0 : i32, i32
  }
  func.func @transform_7(%arg0: i32) -> (i32, i32) {
    %c0_i32 = arith.constant 0 : i32
    %c0_i32_0 = arith.constant 0 : i32
    %c0_i32_1 = arith.constant 0 : i32
    return %c0_i32, %c0_i32_0 : i32, i32
  }
  func.func @transform_8(%arg0: i32) -> (i32, i32) {
    %c0_i32 = arith.constant 0 : i32
    %c0_i32_0 = arith.constant 0 : i32
    %c0_i32_1 = arith.constant 0 : i32
    return %c0_i32, %c0_i32_0 : i32, i32
  }
  func.func @transform_9(%arg0: i32) -> (i32, i32) {
    %c0_i32 = arith.constant 0 : i32
    %c0_i32_0 = arith.constant 0 : i32
    %c0_i32_1 = arith.constant 0 : i32
    return %c0_i32, %c0_i32_0 : i32, i32
  }
  func.func @transform_10(%arg0: i32) -> (i32, i32) {
    %c0_i32 = arith.constant 0 : i32
    %c0_i32_0 = arith.constant 0 : i32
    %c0_i32_1 = arith.constant 0 : i32
    return %c0_i32, %c0_i32_0 : i32, i32
  }
}

</mosaic_0001>

<llo_original>
// kernel: t3_for_finetuning_forward.3
$region0: #{t3_for_finetuning_forward.3}
  #allocation0 [shape = 'u32[]', space=smem, size = 0x4, offset = 0x4, fixed_abs, tag = 'smem constant byte address 0x4 - core index']
  #allocation1 [shape = 'u32[144,128]{1,0:T(1,128)}', space=vmem, size = 0x12000, scoped, tag = 'internal scratch']
  %s0 = inlined_call_operand.vmem [shape: f32[1,64], index: 0, kind: input, shape index: {}]
  %s1 = inlined_call_operand.vmem [shape: f32[16,64], index: 1, kind: input, shape index: {}]
  %s2 = inlined_call_operand.vmem [shape: s32[16,1], index: 2, kind: input, shape index: {}]
  %s3 = inlined_call_operand.vmem [shape: bf16[64,256], index: 3, kind: input, shape index: {}]
  %s4 = inlined_call_operand.vmem [shape: f32[1,256], index: 4, kind: input, shape index: {}]
  %s5 = inlined_call_operand.vmem [shape: f32[32,64], index: 5, kind: input, shape index: {}]
  %s6 = inlined_call_operand.vmem [shape: s32[32,1], index: 6, kind: input, shape index: {}]
  %s7 = inlined_call_operand.vmem [shape: bf16[64,512], index: 7, kind: input, shape index: {}]
  %s8 = inlined_call_operand.vmem [shape: f32[1,512], index: 8, kind: input, shape index: {}]
  %s9 = inlined_call_operand.hbm [shape: f32[32,512], index: 9, kind: output, shape index: {0}]
  %s10 = inlined_call_operand.hbm [shape: f32[1,1], index: 10, kind: output, shape index: {1}]
  %11 = xla_tuple %s9, %s10
  %s12 = sld [smem:[#allocation0]]
  $region54: #{t3_for_finetuning_forward.3} parent=0
    _
  %s14 = ssub.s32 1, %s12
  %s15 = scalar_select 0, %s14, %s12
  $region1: #{t3_for_finetuning_forward.3} parent=0
    #allocation2 [shape = 'u8[65536]{0}', space=vmem, size = 0x10000, scoped, tag = 'output window, operand 0, single buffered']
    #allocation3 [shape = 's32[1]{0}', space=sflag, size = 0x4, scoped, tag = 'scoped memory for t3_for_finetuning_forward.3']
    #allocation4 [shape = 'u8[512]{0}', space=vmem, size = 0x400, scoped, tag = 'output window, operand 1, single buffered']
    #allocation5 [shape = 's32[1]{0}', space=sflag, size = 0x4, scoped, tag = 'scoped memory for t3_for_finetuning_forward.3']
    %16 = vsyncpa [#allocation3], 0
    %17 = vsyncpa [#allocation5], 0
    // Predicated region
    $region2: #{t3_for_finetuning_forward.3} parent=1 // pred_check
      _
    $region3: #{t3_for_finetuning_forward.3} parent=1 // pred_check_branch
      %19 = sbr.rel (0) target = $region5
    $region4: #{t3_for_finetuning_forward.3} parent=1 // pred_region
      _
    $region5: #{t3_for_finetuning_forward.3} parent=1 // pred_fallthru
      _
    // Predicated region
    $region6: #{t3_for_finetuning_forward.3} parent=1 // pred_check
      _
    $region7: #{t3_for_finetuning_forward.3} parent=1 // pred_check_branch
      %21 = sbr.rel (0) target = $region9
    $region8: #{t3_for_finetuning_forward.3} parent=1 // pred_region
      _
    $region9: #{t3_for_finetuning_forward.3} parent=1 // pred_fallthru
      _
    // Predicated region
    $region10: #{t3_for_finetuning_forward.3} parent=1 // pred_check
      _
    $region11: #{t3_for_finetuning_forward.3} parent=1 // pred_check_branch
      %23 = sbr.rel (0) target = $region13
    $region12: #{t3_for_finetuning_forward.3} parent=1 // pred_region
      _
    $region13: #{t3_for_finetuning_forward.3} parent=1 // pred_fallthru
      _
    // Predicated region
    $region14: #{t3_for_finetuning_forward.3} parent=1 // pred_check
      _
    $region15: #{t3_for_finetuning_forward.3} parent=1 // pred_check_branch
      %25 = sbr.rel (0) target = $region17
    $region16: #{t3_for_finetuning_forward.3} parent=1 // pred_region
      _
    $region17: #{t3_for_finetuning_forward.3} parent=1 // pred_fallthru
      _
    // Predicated region
    $region18: #{t3_for_finetuning_forward.3} parent=1 // pred_check
      _
    $region19: #{t3_for_finetuning_forward.3} parent=1 // pred_check_branch
      %27 = sbr.rel (0) target = $region21
    $region20: #{t3_for_finetuning_forward.3} parent=1 // pred_region
      _
    $region21: #{t3_for_finetuning_forward.3} parent=1 // pred_fallthru
      _
    // Predicated region
    $region22: #{t3_for_finetuning_forward.3} parent=1 // pred_check
      _
    $region23: #{t3_for_finetuning_forward.3} parent=1 // pred_check_branch
      %29 = sbr.rel (0) target = $region25
    $region24: #{t3_for_finetuning_forward.3} parent=1 // pred_region
      _
    $region25: #{t3_for_finetuning_forward.3} parent=1 // pred_fallthru
      _
    // Predicated region
    $region26: #{t3_for_finetuning_forward.3} parent=1 // pred_check
      _
    $region27: #{t3_for_finetuning_forward.3} parent=1 // pred_check_branch
      %31 = sbr.rel (0) target = $region29
    $region28: #{t3_for_finetuning_forward.3} parent=1 // pred_region
      _
    $region29: #{t3_for_finetuning_forward.3} parent=1 // pred_fallthru
      _
    // Predicated region
    $region30: #{t3_for_finetuning_forward.3} parent=1 // pred_check
      _
    $region31: #{t3_for_finetuning_forward.3} parent=1 // pred_check_branch
      %33 = sbr.rel (0) target = $region33
    $region32: #{t3_for_finetuning_forward.3} parent=1 // pred_region
      _
    $region33: #{t3_for_finetuning_forward.3} parent=1 // pred_fallthru
      _
    // Predicated region
    $region34: #{t3_for_finetuning_forward.3} parent=1 // pred_check
      _
    $region35: #{t3_for_finetuning_forward.3} parent=1 // pred_check_branch
      %35 = sbr.rel (0) target = $region37
    $region36: #{t3_for_finetuning_forward.3} parent=1 // pred_region
      _
    $region37: #{t3_for_finetuning_forward.3} parent=1 // pred_fallthru
      _
    %v37 = vld [vmem:[%s0] sm:$0x1]
    %v38 = vld [vmem:[%s1] sm:$0xff]
    %v39 = vld [vmem:[%s1 + $0x8] sm:$0xff]
    %v40 = vmul.f32 %v38, %v38
    %v41 = vmul.f32 %v39, %v39
    %vm42 = vcmask 523264
    %v43 = vsel %vm42, %v40, 0.0
    %44 = vadd.xlane.f32.xlu0 %v43
    %v45 = vpop.xlane.xlu0 %44
    %v46 = vsel %vm42, %v41, 0.0
    %47 = vadd.xlane.f32.xlu0 %v46
    %v48 = vpop.xlane.xlu0 %47
    %v49 = vrcp.pop 64.0
    %v50 = vmul.f32 %v45, %v49
    %v51 = vmul.f32 %v48, %v49
    %v52 = vadd.f32 %v50, 1e-06
    %v53 = vadd.f32 %v51, 1e-06
    %v54 = vrsqrt.pop %v52
    %v55 = vrsqrt.pop %v53
    %v56 = vmul.f32 %v38, %v54
    %v57 = vmul.f32 %v39, %v55
    %v59 = vlaneseq
    %v60 = vshrl.u32 %v59, 7
    %v61 = vsub.s32 0, %v60
    %v62 = vrot.slane %v37, %v61
    %v64 = vmul.f32 %v56, %v62
    %v65 = vmul.f32 %v57, %v62
    %v66 = vpack.c.bf16 %v65, %v64
    %v67 = vld [vmem:[%s3] sm:$0xff]
    %v68 = vld [vmem:[%s3 + $0x8] sm:$0xff]
    %v69 = vld [vmem:[%s3 + $0x10] sm:$0xff]
    %v70 = vld [vmem:[%s3 + $0x18] sm:$0xff]
    %v71 = vld [vmem:[%s3 + $0x20] sm:$0xff]
    %v72 = vld [vmem:[%s3 + $0x28] sm:$0xff]
    %v73 = vld [vmem:[%s3 + $0x30] sm:$0xff]
    %v74 = vld [vmem:[%s3 + $0x38] sm:$0xff]
    %v75 = vld [vmem:[%s4] sm:$0x3]
    %v77 = vlaneseq
    %v78 = vshrl.u32 %v77, 7
    %v79 = vsub.s32 0, %v78
    %v80 = vrot.slane %v75, %v79
    %v81 = vlaneseq
    %v82 = vshrl.u32 %v81, 7
    %v83 = vsub.s32 1, %v82
    %v84 = vrot.slane %v75, %v83
    %v95 = vunpack.c.l.b16 %v67
    %v96 = vunpack.c.h.b16 %v67
    %v97 = vunpack.c.l.b16 %v68
    %v98 = vunpack.c.h.b16 %v68
    %v99 = vunpack.c.l.b16 %v69
    %v100 = vunpack.c.h.b16 %v69
    %v101 = vunpack.c.l.b16 %v70
    %v102 = vunpack.c.h.b16 %v70
    %v103 = vunpack.c.l.b16 %v71
    %v104 = vunpack.c.h.b16 %v71
    %v105 = vunpack.c.l.b16 %v72
    %v106 = vunpack.c.h.b16 %v72
    %v107 = vunpack.c.l.b16 %v73
    %v108 = vunpack.c.h.b16 %v73
    %v109 = vunpack.c.l.b16 %v74
    %v110 = vunpack.c.h.b16 %v74
    %v111 = vpack.c.b16 %v97, %v95
    %v112 = vpack.c.b16 %v98, %v96
    %v113 = vpack.c.b16 %v101, %v99
    %v114 = vpack.c.b16 %v102, %v100
    %v115 = vpack.c.b16 %v105, %v103
    %v116 = vpack.c.b16 %v106, %v104
    %v117 = vpack.c.b16 %v109, %v107
    %v118 = vpack.c.b16 %v110, %v108
    %v128 = vsel %vm42, %v66, 0
    %130 = vmatprep.subr.bf16.mxu0 %v112
    %131 = vmatpush1.bf16.msra.mxu0 %v111
    %132 = vmatprep.subr.bf16.mxu0 %v114
    %133 = vmatpush1.bf16.msra.mxu0 %v113
    %134 = vmatprep.subr.bf16.mxu0 %v116
    %135 = vmatpush1.bf16.msra.mxu0 %v115
    %136 = vmatprep.subr.bf16.mxu0 %v118
    %137 = vmatpush1.bf16.msra.mxu0 %v117
    %138 = vmatprep.subr.bf16.mxu0 0
    %139 = vmatpush1.bf16.msra.mxu0 0
    %140 = vmatprep.subr.bf16.mxu0 0
    %141 = vmatpush1.bf16.msra.mxu0 0
    %142 = vmatprep.subr.bf16.mxu0 0
    %143 = vmatpush1.bf16.msra.mxu0 0
    %144 = vmatprep.subr.bf16.mxu0 0
    %145 = vmatpush1.bf16.msra.mxu0 0
    %146 = vmatprep.subr.bf16.mxu0 0
    %147 = vmatpush1.bf16.msra.mxu0 0
    %148 = vmatprep.subr.bf16.mxu0 0
    %149 = vmatpush1.bf16.msra.mxu0 0
    %150 = vmatprep.subr.bf16.mxu0 0
    %151 = vmatpush1.bf16.msra.mxu0 0
    %152 = vmatprep.subr.bf16.mxu0 0
    %153 = vmatpush1.bf16.msra.mxu0 0
    %154 = vmatprep.subr.bf16.mxu0 0
    %155 = vmatpush1.bf16.msra.mxu0 0
    %156 = vmatprep.subr.bf16.mxu0 0
    %157 = vmatpush1.bf16.msra.mxu0 0
    %158 = vmatprep.subr.bf16.mxu0 0
    %159 = vmatpush1.bf16.msra.mxu0 0
    %160 = vmatprep.subr.bf16.mxu0 0
    %161 = vmatpush1.bf16.msra.mxu0 0
    %162 = vmatprep.mubr.bf16.mxu0 0
    %163 = vmatmul.mubr.bf16.gmra.mrb[0].mxu0 %v128
    %v164 = vpop.f32.mrb[0].mxu0
    %v165 = vadd.f32 %v80, %v164
    %v166 = vpop.f32.mrb[0].mxu0
    %v167 = vadd.f32 %v84, %v166
    %v168 = vpop.f32.mrb[0].mxu0
    %v169 = vadd.f32 %v80, %v168
    %v170 = vpop.f32.mrb[0].mxu0
    %v171 = vadd.f32 %v84, %v170
    %172 = vdwg.mxu0
    %v173 = vld [vmem:[%s2] sm:$0xff]
    %v174 = vld [vmem:[%s2 + $0x8] sm:$0xff]
    %v175 = vmax.f32 %v165, %v167
    %176 = vmax.xlane.f32.xlu0 %v175
    %v177 = vpop.xlane.xlu0 %176
    %v178 = vmax.f32 %v169, %v171
    %179 = vmax.xlane.f32.xlu0 %v178
    %v180 = vpop.xlane.xlu0 %179
    %v181 = vsub.f32 %v165, %v177
    %v182 = vsub.f32 %v167, %v177
    %v183 = vsub.f32 %v169, %v180
    %v184 = vsub.f32 %v171, %v180
    %v185 = vmul.f32 %v181, 1.442695
    %v186 = vpow.pop %v185
    %v187 = vmul.f32 %v182, 1.442695
    %v188 = vpow.pop %v187
    %v189 = vmul.f32 %v183, 1.442695
    %v190 = vpow.pop %v189
    %v191 = vmul.f32 %v184, 1.442695
    %v192 = vpow.pop %v191
    %v193 = vadd.f32 %v186, %v188
    %194 = vadd.xlane.f32.xlu0 %v193
    %v195 = vpop.xlane.xlu0 %194
    %v196 = vadd.f32 %v190, %v192
    %197 = vadd.xlane.f32.xlu0 %v196
    %v198 = vpop.xlane.xlu0 %197
    %v199 = vlog2.pop %v195
    %v200 = vmul.f32 %v199, 0.6931472
    %v201 = vlog2.pop %v198
    %v202 = vmul.f32 %v201, 0.6931472
    %v203 = vsub.f32 %v181, %v200
    %v204 = vsub.f32 %v182, %v200
    %v205 = vsub.f32 %v183, %v202
    %v206 = vsub.f32 %v184, %v202
    %v207 = vlaneseq
    %v208 = vand.u32 %v207, 127
    %v209 = vadd.s32 %v208, 128
    %vm210 = vcmp.ne.s32.totalorder %v173, 4294967196
    %vm211 = vcmp.ne.s32.totalorder %v174, 4294967196
    %212 = vset.pattern.permute.xlu0 0
    %213 = vperm.xlu0 %212, %v173
    %v214 = vpop.permute.xlu0 %213
    %215 = vset.pattern.permute.xlu0 0
    %216 = vperm.xlu0 %215, %v174
    %v217 = vpop.permute.xlu0 %216
    %vm218 = vcmp.eq.s32.totalorder %v208, %v214
    %vm219 = vcmp.eq.s32.totalorder %v209, %v214
    %vm220 = vcmp.eq.s32.totalorder %v208, %v217
    %vm221 = vcmp.eq.s32.totalorder %v209, %v217
    %v222 = vsel %vm210, 1, 0
    %v223 = vsel %vm211, 1, 0
    %224 = vset.pattern.permute.xlu0 0
    %225 = vperm.xlu0 %224, %v222
    %v226 = vpop.permute.xlu0 %225
    %227 = vset.pattern.permute.xlu0 0
    %228 = vperm.xlu0 %227, %v223
    %v229 = vpop.permute.xlu0 %228
    %vm230 = vcmp.eq.s32.totalorder %v226, 1
    %vm231 = vcmp.eq.s32.totalorder %v229, 1
    %vm232 = vmand %vm218, %vm230
    %vm233 = vmand %vm219, %vm230
    %vm234 = vmand %vm220, %vm231
    %vm235 = vmand %vm221, %vm231
    %v236 = vsel %vm232, %v203, 0.0
    %v237 = vsel %vm233, %v204, 0.0
    %v238 = vsel %vm234, %v205, 0.0
    %v239 = vsel %vm235, %v206, 0.0
    %v240 = vadd.f32 %v236, %v237
    %v241 = vadd.f32 %v240, %v238
    %v242 = vadd.f32 %v241, %v239
    %243 = vadd.xlane.f32.xlu0 %v242
    %v244 = vpop.xlane.xlu0 %243
    %v245 = vrot.slane %v244, 4
    %v246 = vadd.f32 %v244, %v245
    %v247 = vrot.slane %v246, 2
    %v248 = vadd.f32 %v246, %v247
    %v249 = vrot.slane %v248, 1
    %v250 = vadd.f32 %v248, %v249
    %s251 = vtos %v250
    %v252 = vstv %s251
    %v253 = vsub.f32 0.0, %v252
    %v254 = vcvt.s32.f32 %v222
    %v255 = vcvt.s32.f32 %v223
    %vm256 = vcmask 7168
    %v257 = vsel %vm256, %v254, 0.0
    %v258 = vsel %vm256, %v255, 0.0
    %v259 = vadd.f32 %v257, %v258
    %260 = vadd.xlane.f32.xlu0 %v259
    %v261 = vpop.xlane.xlu0 %260
    %v262 = vrot.slane %v261, 4
    %v263 = vadd.f32 %v261, %v262
    %v264 = vrot.slane %v263, 2
    %v265 = vadd.f32 %v263, %v264
    %v266 = vrot.slane %v265, 1
    %v267 = vadd.f32 %v265, %v266
    %s268 = vtos %v267
    %v269 = vstv %s268
    %v270 = vld [vmem:[%s5] sm:$0xff]
    %v271 = vld [vmem:[%s5 + $0x8] sm:$0xff]
    %v272 = vld [vmem:[%s5 + $0x10] sm:$0xff]
    %v273 = vld [vmem:[%s5 + $0x18] sm:$0xff]
    %v274 = vmul.f32 %v270, %v270
    %v275 = vmul.f32 %v271, %v271
    %v276 = vmul.f32 %v272, %v272
    %v277 = vmul.f32 %v273, %v273
    %v278 = vsel %vm42, %v274, 0.0
    %279 = vadd.xlane.f32.xlu0 %v278
    %v280 = vpop.xlane.xlu0 %279
    %v281 = vsel %vm42, %v275, 0.0
    %282 = vadd.xlane.f32.xlu0 %v281
    %v283 = vpop.xlane.xlu0 %282
    %v284 = vsel %vm42, %v276, 0.0
    %285 = vadd.xlane.f32.xlu0 %v284
    %v286 = vpop.xlane.xlu0 %285
    %v287 = vsel %vm42, %v277, 0.0
    %288 = vadd.xlane.f32.xlu0 %v287
    %v289 = vpop.xlane.xlu0 %288
    %v290 = vmul.f32 %v280, %v49
    %v291 = vmul.f32 %v283, %v49
    %v292 = vmul.f32 %v286, %v49
    %v293 = vmul.f32 %v289, %v49
    %v294 = vadd.f32 %v290, 1e-06
    %v295 = vadd.f32 %v291, 1e-06
    %v296 = vadd.f32 %v292, 1e-06
    %v297 = vadd.f32 %v293, 1e-06
    %v298 = vrsqrt.pop %v294
    %v299 = vrsqrt.pop %v295
    %v300 = vrsqrt.pop %v296
    %v301 = vrsqrt.pop %v297
    %v302 = vmul.f32 %v270, %v298
    %v303 = vmul.f32 %v271, %v299
    %v304 = vmul.f32 %v272, %v300
    %v305 = vmul.f32 %v273, %v301
    %v306 = vmul.f32 %v302, %v62
    %v307 = vmul.f32 %v303, %v62
    %v308 = vmul.f32 %v304, %v62
    %v309 = vmul.f32 %v305, %v62
    %v310 = vpack.c.bf16 %v307, %v306
    %v311 = vpack.c.bf16 %v309, %v308
    %v312 = vld [vmem:[%s7] sm:$0xff]
    %v313 = vld [vmem:[%s7 + $0x8] sm:$0xff]
    %v314 = vld [vmem:[%s7 + $0x10] sm:$0xff]
    %v315 = vld [vmem:[%s7 + $0x18] sm:$0xff]
    %v316 = vld [vmem:[%s7 + $0x20] sm:$0xff]
    %v317 = vld [vmem:[%s7 + $0x28] sm:$0xff]
    %v318 = vld [vmem:[%s7 + $0x30] sm:$0xff]
    %v319 = vld [vmem:[%s7 + $0x38] sm:$0xff]
    %v320 = vld [vmem:[%s7 + $0x40] sm:$0xff]
    %v321 = vld [vmem:[%s7 + $0x48] sm:$0xff]
    %v322 = vld [vmem:[%s7 + $0x50] sm:$0xff]
    %v323 = vld [vmem:[%s7 + $0x58] sm:$0xff]
    %v324 = vld [vmem:[%s7 + $0x60] sm:$0xff]
    %v325 = vld [vmem:[%s7 + $0x68] sm:$0xff]
    %v326 = vld [vmem:[%s7 + $0x70] sm:$0xff]
    %v327 = vld [vmem:[%s7 + $0x78] sm:$0xff]
    %v328 = vld [vmem:[%s8] sm:$0xf]
    %v330 = vlaneseq
    %v331 = vshrl.u32 %v330, 7
    %v332 = vsub.s32 0, %v331
    %v333 = vrot.slane %v328, %v332
    %v334 = vlaneseq
    %v335 = vshrl.u32 %v334, 7
    %v336 = vsub.s32 1, %v335
    %v337 = vrot.slane %v328, %v336
    %v338 = vlaneseq
    %v339 = vshrl.u32 %v338, 7
    %v340 = vsub.s32 2, %v339
    %v341 = vrot.slane %v328, %v340
    %v342 = vlaneseq
    %v343 = vshrl.u32 %v342, 7
    %v344 = vsub.s32 3, %v343
    %v345 = vrot.slane %v328, %v344
    %v366 = vunpack.c.l.b16 %v312
    %v367 = vunpack.c.h.b16 %v312
    %v368 = vunpack.c.l.b16 %v313
    %v369 = vunpack.c.h.b16 %v313
    %v370 = vunpack.c.l.b16 %v314
    %v371 = vunpack.c.h.b16 %v314
    %v372 = vunpack.c.l.b16 %v315
    %v373 = vunpack.c.h.b16 %v315
    %v374 = vunpack.c.l.b16 %v316
    %v375 = vunpack.c.h.b16 %v316
    %v376 = vunpack.c.l.b16 %v317
    %v377 = vunpack.c.h.b16 %v317
    %v378 = vunpack.c.l.b16 %v318
    %v379 = vunpack.c.h.b16 %v318
    %v380 = vunpack.c.l.b16 %v319
    %v381 = vunpack.c.h.b16 %v319
    %v382 = vunpack.c.l.b16 %v320
    %v383 = vunpack.c.h.b16 %v320
    %v384 = vunpack.c.l.b16 %v321
    %v385 = vunpack.c.h.b16 %v321
    %v386 = vunpack.c.l.b16 %v322
    %v387 = vunpack.c.h.b16 %v322
    %v388 = vunpack.c.l.b16 %v323
    %v389 = vunpack.c.h.b16 %v323
    %v390 = vunpack.c.l.b16 %v324
    %v391 = vunpack.c.h.b16 %v324
    %v392 = vunpack.c.l.b16 %v325
    %v393 = vunpack.c.h.b16 %v325
    %v394 = vunpack.c.l.b16 %v326
    %v395 = vunpack.c.h.b16 %v326
    %v396 = vunpack.c.l.b16 %v327
    %v397 = vunpack.c.h.b16 %v327
    %v398 = vpack.c.b16 %v370, %v366
    %v399 = vpack.c.b16 %v371, %v367
    %v400 = vpack.c.b16 %v372, %v368
    %v401 = vpack.c.b16 %v373, %v369
    %v402 = vpack.c.b16 %v378, %v374
    %v403 = vpack.c.b16 %v379, %v375
    %v404 = vpack.c.b16 %v380, %v376
    %v405 = vpack.c.b16 %v381, %v377
    %v406 = vpack.c.b16 %v386, %v382
    %v407 = vpack.c.b16 %v387, %v383
    %v408 = vpack.c.b16 %v388, %v384
    %v409 = vpack.c.b16 %v389, %v385
    %v410 = vpack.c.b16 %v394, %v390
    %v411 = vpack.c.b16 %v395, %v391
    %v412 = vpack.c.b16 %v396, %v392
    %v413 = vpack.c.b16 %v397, %v393
    %v431 = vsel %vm42, %v310, 0
    %v434 = vsel %vm42, %v311, 0
    %436 = vmatprep.subr.bf16.mxu0 %v399
    %437 = vmatpush1.bf16.msra.mxu0 %v398
    %438 = vmatprep.subr.bf16.mxu0 %v403
    %439 = vmatpush1.bf16.msra.mxu0 %v402
    %440 = vmatprep.subr.bf16.mxu0 %v407
    %441 = vmatpush1.bf16.msra.mxu0 %v406
    %442 = vmatprep.subr.bf16.mxu0 %v411
    %443 = vmatpush1.bf16.msra.mxu0 %v410
    %444 = vmatprep.subr.bf16.mxu0 0
    %445 = vmatpush1.bf16.msra.mxu0 0
    %446 = vmatprep.subr.bf16.mxu0 0
    %447 = vmatpush1.bf16.msra.mxu0 0
    %448 = vmatprep.subr.bf16.mxu0 0
    %449 = vmatpush1.bf16.msra.mxu0 0
    %450 = vmatprep.subr.bf16.mxu0 0
    %451 = vmatpush1.bf16.msra.mxu0 0
    %452 = vmatprep.subr.bf16.mxu0 0
    %453 = vmatpush1.bf16.msra.mxu0 0
    %454 = vmatprep.subr.bf16.mxu0 0
    %455 = vmatpush1.bf16.msra.mxu0 0
    %456 = vmatprep.subr.bf16.mxu0 0
    %457 = vmatpush1.bf16.msra.mxu0 0
    %458 = vmatprep.subr.bf16.mxu0 0
    %459 = vmatpush1.bf16.msra.mxu0 0
    %460 = vmatprep.subr.bf16.mxu0 0
    %461 = vmatpush1.bf16.msra.mxu0 0
    %462 = vmatprep.subr.bf16.mxu0 0
    %463 = vmatpush1.bf16.msra.mxu0 0
    %464 = vmatprep.subr.bf16.mxu0 0
    %465 = vmatpush1.bf16.msra.mxu0 0
    %466 = vmatprep.subr.bf16.mxu0 0
    %467 = vmatpush1.bf16.msra.mxu0 0
    %468 = vmatprep.mubr.bf16.mxu0 0
    %469 = vmatmul.mubr.bf16.gmra.mrb[0].mxu0 %v431
    %v470 = vpop.f32.mrb[0].mxu0
    %v471 = vadd.f32 %v333, %v470
    %v472 = vpop.f32.mrb[0].mxu0
    %v473 = vadd.f32 %v337, %v472
    %v474 = vpop.f32.mrb[0].mxu0
    %v475 = vadd.f32 %v333, %v474
    %v476 = vpop.f32.mrb[0].mxu0
    %v477 = vadd.f32 %v337, %v476
    %478 = vmatprep.mubr.bf16.mxu0 0
    %479 = vmatmul.mubr.bf16.gmra.mrb[0].mxu0 %v434
    %v480 = vpop.f32.mrb[0].mxu0
    %v481 = vadd.f32 %v333, %v480
    %v482 = vpop.f32.mrb[0].mxu0
    %v483 = vadd.f32 %v337, %v482
    %v484 = vpop.f32.mrb[0].mxu0
    %v485 = vadd.f32 %v333, %v484
    %v486 = vpop.f32.mrb[0].mxu0
    %v487 = vadd.f32 %v337, %v486
    %488 = vdwg.mxu0
    %489 = vmatprep.subr.bf16.mxu0 %v401
    %490 = vmatpush1.bf16.msra.mxu0 %v400
    %491 = vmatprep.subr.bf16.mxu0 %v405
    %492 = vmatpush1.bf16.msra.mxu0 %v404
    %493 = vmatprep.subr.bf16.mxu0 %v409
    %494 = vmatpush1.bf16.msra.mxu0 %v408
    %495 = vmatprep.subr.bf16.mxu0 %v413
    %496 = vmatpush1.bf16.msra.mxu0 %v412
    %497 = vmatprep.subr.bf16.mxu0 0
    %498 = vmatpush1.bf16.msra.mxu0 0
    %499 = vmatprep.subr.bf16.mxu0 0
    %500 = vmatpush1.bf16.msra.mxu0 0
    %501 = vmatprep.subr.bf16.mxu0 0
    %502 = vmatpush1.bf16.msra.mxu0 0
    %503 = vmatprep.subr.bf16.mxu0 0
    %504 = vmatpush1.bf16.msra.mxu0 0
    %505 = vmatprep.subr.bf16.mxu0 0
    %506 = vmatpush1.bf16.msra.mxu0 0
    %507 = vmatprep.subr.bf16.mxu0 0
    %508 = vmatpush1.bf16.msra.mxu0 0
    %509 = vmatprep.subr.bf16.mxu0 0
    %510 = vmatpush1.bf16.msra.mxu0 0
    %511 = vmatprep.subr.bf16.mxu0 0
    %512 = vmatpush1.bf16.msra.mxu0 0
    %513 = vmatprep.subr.bf16.mxu0 0
    %514 = vmatpush1.bf16.msra.mxu0 0
    %515 = vmatprep.subr.bf16.mxu0 0
    %516 = vmatpush1.bf16.msra.mxu0 0
    %517 = vmatprep.subr.bf16.mxu0 0
    %518 = vmatpush1.bf16.msra.mxu0 0
    %519 = vmatprep.subr.bf16.mxu0 0
    %520 = vmatpush1.bf16.msra.mxu0 0
    %521 = vmatprep.mubr.bf16.mxu0 0
    %522 = vmatmul.mubr.bf16.gmra.mrb[0].mxu0 %v431
    %v523 = vpop.f32.mrb[0].mxu0
    %v524 = vadd.f32 %v341, %v523
    %v525 = vpop.f32.mrb[0].mxu0
    %v526 = vadd.f32 %v345, %v525
    %v527 = vpop.f32.mrb[0].mxu0
    %v528 = vadd.f32 %v341, %v527
    %v529 = vpop.f32.mrb[0].mxu0
    %v530 = vadd.f32 %v345, %v529
    %531 = vmatprep.mubr.bf16.mxu0 0
    %532 = vmatmul.mubr.bf16.gmra.mrb[0].mxu0 %v434
    %v533 = vpop.f32.mrb[0].mxu0
    %v534 = vadd.f32 %v341, %v533
    %v535 = vpop.f32.mrb[0].mxu0
    %v536 = vadd.f32 %v345, %v535
    %v537 = vpop.f32.mrb[0].mxu0
    %v538 = vadd.f32 %v341, %v537
    %v539 = vpop.f32.mrb[0].mxu0
    %v540 = vadd.f32 %v345, %v539
    %541 = vdwg.mxu0
    %542 = vst [vmem:[#allocation2] sm:$0xff] %v471
    %543 = vst [vmem:[#allocation2 + $0x8] sm:$0xff] %v473
    %544 = vst [vmem:[#allocation2 + $0x10] sm:$0xff] %v524
    %545 = vst [vmem:[#allocation2 + $0x18] sm:$0xff] %v526
    %546 = vst [vmem:[#allocation2 + $0x20] sm:$0xff] %v475
    %547 = vst [vmem:[#allocation2 + $0x28] sm:$0xff] %v477
    %548 = vst [vmem:[#allocation2 + $0x30] sm:$0xff] %v528
    %549 = vst [vmem:[#allocation2 + $0x38] sm:$0xff] %v530
    %550 = vst [vmem:[#allocation2 + $0x40] sm:$0xff] %v481
    %551 = vst [vmem:[#allocation2 + $0x48] sm:$0xff] %v483
    %552 = vst [vmem:[#allocation2 + $0x50] sm:$0xff] %v534
    %553 = vst [vmem:[#allocation2 + $0x58] sm:$0xff] %v536
    %554 = vst [vmem:[#allocation2 + $0x60] sm:$0xff] %v485
    %555 = vst [vmem:[#allocation2 + $0x68] sm:$0xff] %v487
    %556 = vst [vmem:[#allocation2 + $0x70] sm:$0xff] %v538
    %557 = vst [vmem:[#allocation2 + $0x78] sm:$0xff] %v540
    %v558 = vld [vmem:[%s6] sm:$0xff]
    %v559 = vld [vmem:[%s6 + $0x8] sm:$0xff]
    %v560 = vld [vmem:[%s6 + $0x10] sm:$0xff]
    %v561 = vld [vmem:[%s6 + $0x18] sm:$0xff]
    %v562 = vmax.f32 %v471, %v473
    %v563 = vmax.f32 %v562, %v524
    %v564 = vmax.f32 %v563, %v526
    %565 = vmax.xlane.f32.xlu0 %v564
    %v566 = vpop.xlane.xlu0 %565
    %v567 = vmax.f32 %v475, %v477
    %v568 = vmax.f32 %v567, %v528
    %v569 = vmax.f32 %v568, %v530
    %570 = vmax.xlane.f32.xlu0 %v569
    %v571 = vpop.xlane.xlu0 %570
    %v572 = vmax.f32 %v481, %v483
    %v573 = vmax.f32 %v572, %v534
    %v574 = vmax.f32 %v573, %v536
    %575 = vmax.xlane.f32.xlu0 %v574
    %v576 = vpop.xlane.xlu0 %575
    %v577 = vmax.f32 %v485, %v487
    %v578 = vmax.f32 %v577, %v538
    %v579 = vmax.f32 %v578, %v540
    %580 = vmax.xlane.f32.xlu0 %v579
    %v581 = vpop.xlane.xlu0 %580
    %v582 = vsub.f32 %v471, %v566
    %v583 = vsub.f32 %v473, %v566
    %v584 = vsub.f32 %v524, %v566
    %v585 = vsub.f32 %v526, %v566
    %v586 = vsub.f32 %v475, %v571
    %v587 = vsub.f32 %v477, %v571
    %v588 = vsub.f32 %v528, %v571
    %v589 = vsub.f32 %v530, %v571
    %v590 = vsub.f32 %v481, %v576
    %v591 = vsub.f32 %v483, %v576
    %v592 = vsub.f32 %v534, %v576
    %v593 = vsub.f32 %v536, %v576
    %v594 = vsub.f32 %v485, %v581
    %v595 = vsub.f32 %v487, %v581
    %v596 = vsub.f32 %v538, %v581
    %v597 = vsub.f32 %v540, %v581
    %v598 = vmul.f32 %v582, 1.442695
    %v599 = vpow.pop %v598
    %v600 = vmul.f32 %v583, 1.442695
    %v601 = vpow.pop %v600
    %v602 = vmul.f32 %v584, 1.442695
    %v603 = vpow.pop %v602
    %v604 = vmul.f32 %v585, 1.442695
    %v605 = vpow.pop %v604
    %v606 = vmul.f32 %v586, 1.442695
    %v607 = vpow.pop %v606
    %v608 = vmul.f32 %v587, 1.442695
    %v609 = vpow.pop %v608
    %v610 = vmul.f32 %v588, 1.442695
    %v611 = vpow.pop %v610
    %v612 = vmul.f32 %v589, 1.442695
    %v613 = vpow.pop %v612
    %v614 = vmul.f32 %v590, 1.442695
    %v615 = vpow.pop %v614
    %v616 = vmul.f32 %v591, 1.442695
    %v617 = vpow.pop %v616
    %v618 = vmul.f32 %v592, 1.442695
    %v619 = vpow.pop %v618
    %v620 = vmul.f32 %v593, 1.442695
    %v621 = vpow.pop %v620
    %v622 = vmul.f32 %v594, 1.442695
    %v623 = vpow.pop %v622
    %v624 = vmul.f32 %v595, 1.442695
    %v625 = vpow.pop %v624
    %v626 = vmul.f32 %v596, 1.442695
    %v627 = vpow.pop %v626
    %v628 = vmul.f32 %v597, 1.442695
    %v629 = vpow.pop %v628
    %v630 = vadd.f32 %v599, %v601
    %v631 = vadd.f32 %v630, %v603
    %v632 = vadd.f32 %v631, %v605
    %633 = vadd.xlane.f32.xlu0 %v632
    %v634 = vpop.xlane.xlu0 %633
    %v635 = vadd.f32 %v607, %v609
    %v636 = vadd.f32 %v635, %v611
    %v637 = vadd.f32 %v636, %v613
    %638 = vadd.xlane.f32.xlu0 %v637
    %v639 = vpop.xlane.xlu0 %638
    %v640 = vadd.f32 %v615, %v617
    %v641 = vadd.f32 %v640, %v619
    %v642 = vadd.f32 %v641, %v621
    %643 = vadd.xlane.f32.xlu0 %v642
    %v644 = vpop.xlane.xlu0 %643
    %v645 = vadd.f32 %v623, %v625
    %v646 = vadd.f32 %v645, %v627
    %v647 = vadd.f32 %v646, %v629
    %648 = vadd.xlane.f32.xlu0 %v647
    %v649 = vpop.xlane.xlu0 %648
    %v650 = vlog2.pop %v634
    %v651 = vmul.f32 %v650, 0.6931472
    %v652 = vlog2.pop %v639
    %v653 = vmul.f32 %v652, 0.6931472
    %v654 = vlog2.pop %v644
    %v655 = vmul.f32 %v654, 0.6931472
    %v656 = vlog2.pop %v649
    %v657 = vmul.f32 %v656, 0.6931472
    %v658 = vsub.f32 %v582, %v651
    %v659 = vsub.f32 %v583, %v651
    %v660 = vsub.f32 %v584, %v651
    %v661 = vsub.f32 %v585, %v651
    %v662 = vsub.f32 %v586, %v653
    %v663 = vsub.f32 %v587, %v653
    %v664 = vsub.f32 %v588, %v653
    %v665 = vsub.f32 %v589, %v653
    %v666 = vsub.f32 %v590, %v655
    %v667 = vsub.f32 %v591, %v655
    %v668 = vsub.f32 %v592, %v655
    %v669 = vsub.f32 %v593, %v655
    %v670 = vsub.f32 %v594, %v657
    %v671 = vsub.f32 %v595, %v657
    %v672 = vsub.f32 %v596, %v657
    %v673 = vsub.f32 %v597, %v657
    %v674 = vadd.s32 %v208, 256
    %v675 = vadd.s32 %v208, 384
    %vm676 = vcmp.ne.s32.totalorder %v558, 4294967196
    %vm677 = vcmp.ne.s32.totalorder %v559, 4294967196
    %vm678 = vcmp.ne.s32.totalorder %v560, 4294967196
    %vm679 = vcmp.ne.s32.totalorder %v561, 4294967196
    %680 = vset.pattern.permute.xlu0 0
    %681 = vperm.xlu0 %680, %v558
    %v682 = vpop.permute.xlu0 %681
    %683 = vset.pattern.permute.xlu0 0
    %684 = vperm.xlu0 %683, %v559
    %v685 = vpop.permute.xlu0 %684
    %686 = vset.pattern.permute.xlu0 0
    %687 = vperm.xlu0 %686, %v560
    %v688 = vpop.permute.xlu0 %687
    %689 = vset.pattern.permute.xlu0 0
    %690 = vperm.xlu0 %689, %v561
    %v691 = vpop.permute.xlu0 %690
    %vm692 = vcmp.eq.s32.totalorder %v208, %v682
    %vm693 = vcmp.eq.s32.totalorder %v209, %v682
    %vm694 = vcmp.eq.s32.totalorder %v674, %v682
    %vm695 = vcmp.eq.s32.totalorder %v675, %v682
    %vm696 = vcmp.eq.s32.totalorder %v208, %v685
    %vm697 = vcmp.eq.s32.totalorder %v209, %v685
    %vm698 = vcmp.eq.s32.totalorder %v674, %v685
    %vm699 = vcmp.eq.s32.totalorder %v675, %v685
    %vm700 = vcmp.eq.s32.totalorder %v208, %v688
    %vm701 = vcmp.eq.s32.totalorder %v209, %v688
    %vm702 = vcmp.eq.s32.totalorder %v674, %v688
    %vm703 = vcmp.eq.s32.totalorder %v675, %v688
    %vm704 = vcmp.eq.s32.totalorder %v208, %v691
    %vm705 = vcmp.eq.s32.totalorder %v209, %v691
    %vm706 = vcmp.eq.s32.totalorder %v674, %v691
    %vm707 = vcmp.eq.s32.totalorder %v675, %v691
    %v708 = vsel %vm676, 1, 0
    %v709 = vsel %vm677, 1, 0
    %v710 = vsel %vm678, 1, 0
    %v711 = vsel %vm679, 1, 0
    %712 = vset.pattern.permute.xlu0 0
    %713 = vperm.xlu0 %712, %v708
    %v714 = vpop.permute.xlu0 %713
    %715 = vset.pattern.permute.xlu0 0
    %716 = vperm.xlu0 %715, %v709
    %v717 = vpop.permute.xlu0 %716
    %718 = vset.pattern.permute.xlu0 0
    %719 = vperm.xlu0 %718, %v710
    %v720 = vpop.permute.xlu0 %719
    %721 = vset.pattern.permute.xlu0 0
    %722 = vperm.xlu0 %721, %v711
    %v723 = vpop.permute.xlu0 %722
    %vm724 = vcmp.eq.s32.totalorder %v714, 1
    %vm725 = vcmp.eq.s32.totalorder %v717, 1
    %vm726 = vcmp.eq.s32.totalorder %v720, 1
    %vm727 = vcmp.eq.s32.totalorder %v723, 1
    %vm728 = vmand %vm692, %vm724
    %vm729 = vmand %vm693, %vm724
    %vm730 = vmand %vm694, %vm724
    %vm731 = vmand %vm695, %vm724
    %vm732 = vmand %vm696, %vm725
    %vm733 = vmand %vm697, %vm725
    %vm734 = vmand %vm698, %vm725
    %vm735 = vmand %vm699, %vm725
    %vm736 = vmand %vm700, %vm726
    %vm737 = vmand %vm701, %vm726
    %vm738 = vmand %vm702, %vm726
    %vm739 = vmand %vm703, %vm726
    %vm740 = vmand %vm704, %vm727
    %vm741 = vmand %vm705, %vm727
    %vm742 = vmand %vm706, %vm727
    %vm743 = vmand %vm707, %vm727
    %v744 = vsel %vm728, %v658, 0.0
    %v745 = vsel %vm729, %v659, 0.0
    %v746 = vsel %vm730, %v660, 0.0
    %v747 = vsel %vm731, %v661, 0.0
    %v748 = vsel %vm732, %v662, 0.0
    %v749 = vsel %vm733, %v663, 0.0
    %v750 = vsel %vm734, %v664, 0.0
    %v751 = vsel %vm735, %v665, 0.0
    %v752 = vsel %vm736, %v666, 0.0
    %v753 = vsel %vm737, %v667, 0.0
    %v754 = vsel %vm738, %v668, 0.0
    %v755 = vsel %vm739, %v669, 0.0
    %v756 = vsel %vm740, %v670, 0.0
    %v757 = vsel %vm741, %v671, 0.0
    %v758 = vsel %vm742, %v672, 0.0
    %v759 = vsel %vm743, %v673, 0.0
    %v760 = vadd.f32 %v744, %v745
    %v761 = vadd.f32 %v760, %v746
    %v762 = vadd.f32 %v761, %v747
    %v763 = vadd.f32 %v762, %v748
    %v764 = vadd.f32 %v763, %v749
    %v765 = vadd.f32 %v764, %v750
    %v766 = vadd.f32 %v765, %v751
    %v767 = vadd.f32 %v766, %v752
    %v768 = vadd.f32 %v767, %v753
    %v769 = vadd.f32 %v768, %v754
    %v770 = vadd.f32 %v769, %v755
    %v771 = vadd.f32 %v770, %v756
    %v772 = vadd.f32 %v771, %v757
    %v773 = vadd.f32 %v772, %v758
    %v774 = vadd.f32 %v773, %v759
    %775 = vadd.xlane.f32.xlu0 %v774
    %v776 = vpop.xlane.xlu0 %775
    %v777 = vrot.slane %v776, 4
    %v778 = vadd.f32 %v776, %v777
    %v779 = vrot.slane %v778, 2
    %v780 = vadd.f32 %v778, %v779
    %v781 = vrot.slane %v780, 1
    %v782 = vadd.f32 %v780, %v781
    %s783 = vtos %v782
    %v784 = vstv %s783
    %v785 = vsub.f32 0.0, %v784
    %v786 = vcvt.s32.f32 %v708
    %v787 = vcvt.s32.f32 %v709
    %v788 = vcvt.s32.f32 %v710
    %v789 = vcvt.s32.f32 %v711
    %v790 = vsel %vm256, %v786, 0.0
    %v791 = vsel %vm256, %v787, 0.0
    %v792 = vadd.f32 %v790, %v791
    %v793 = vsel %vm256, %v788, 0.0
    %v794 = vadd.f32 %v792, %v793
    %v795 = vsel %vm256, %v789, 0.0
    %v796 = vadd.f32 %v794, %v795
    %797 = vadd.xlane.f32.xlu0 %v796
    %v798 = vpop.xlane.xlu0 %797
    %v799 = vrot.slane %v798, 4
    %v800 = vadd.f32 %v798, %v799
    %v801 = vrot.slane %v800, 2
    %v802 = vadd.f32 %v800, %v801
    %v803 = vrot.slane %v802, 1
    %v804 = vadd.f32 %v802, %v803
    %s805 = vtos %v804
    %v806 = vstv %s805
    %v807 = vmax.f32 %v269, 1.0
    %v808 = vrcp.pop %v807
    %v809 = vmul.f32 %v253, %v808
    %v810 = vmax.f32 %v806, 1.0
    %v811 = vrcp.pop %v810
    %v812 = vmul.f32 %v785, %v811
    %v813 = vadd.f32 %v809, %v812
    %vm814 = vcmask 0
    %815 = vst.msk [vmem:[#allocation4] sm:$0x1] %vm814, %v813
    // Predicated region
    $region38: #{t3_for_finetuning_forward.3} parent=1 // pred_check
      _
    $region39: #{t3_for_finetuning_forward.3} parent=1 // pred_check_branch
      %817 = sbr.rel (0) target = $region41
    $region40: #{t3_for_finetuning_forward.3} parent=1 // pred_region
      %s819 = ssub.s32 2048, 2048
      %820 = vsyncadd [#allocation3], %s819
      %s821 = sshll.u32 [#allocation2], 4
      %s822 = int_to_ptr.vmem [resolvable:$true] %s821
      %827 = dma.vmem_to_hbm [thread:$0]  %s822, 2048, %s9, [#allocation3], 512, 512, 32
    $region41: #{t3_for_finetuning_forward.3} parent=1 // pred_fallthru
      _
    // Predicated region
    $region42: #{t3_for_finetuning_forward.3} parent=1 // pred_check
      _
    $region43: #{t3_for_finetuning_forward.3} parent=1 // pred_check_branch
      %829 = sbr.rel (0) target = $region45
    $region44: #{t3_for_finetuning_forward.3} parent=1 // pred_region
      %s831 = ssub.s32 16, 16
      %832 = vsyncadd [#allocation5], %s831
      %s834 = sshll.u32 [#allocation4], 4
      %s835 = int_to_ptr.vmem [resolvable:$true] %s834
      %837 = dma.vmem_to_hbm [thread:$0]  %s835, 16, %s10, [#allocation5]
    $region45: #{t3_for_finetuning_forward.3} parent=1 // pred_fallthru
      _
    // Predicated region
    $region46: #{t3_for_finetuning_forward.3} parent=1 // pred_check
      _
    $region47: #{t3_for_finetuning_forward.3} parent=1 // pred_check_branch
      %839 = sbr.rel (0) target = $region49
    $region48: #{t3_for_finetuning_forward.3} parent=1 // pred_region
      %840 = dma.done [#allocation3], 2048
    $region49: #{t3_for_finetuning_forward.3} parent=1 // pred_fallthru
      _
    // Predicated region
    $region50: #{t3_for_finetuning_forward.3} parent=1 // pred_check
      _
    $region51: #{t3_for_finetuning_forward.3} parent=1 // pred_check_branch
      %842 = sbr.rel (0) target = $region53
    $region52: #{t3_for_finetuning_forward.3} parent=1 // pred_region
      %843 = dma.done [#allocation5], 16
    $region53: #{t3_for_finetuning_forward.3} parent=1 // pred_fallthru
      _
    %844 = vsyncpa [#allocation3], 1
    %845 = vsyncpa [#allocation5], 1

// kernel: t3_for_finetuning_forward.2
$region0: #{t3_for_finetuning_forward.2}
  #allocation0 [shape = 'u32[]', space=smem, size = 0x4, offset = 0x4, fixed_abs, tag = 'smem constant byte address 0x4 - core index']
  #allocation1 [shape = 'u32[144,128]{1,0:T(1,128)}', space=vmem, size = 0x12000, scoped, tag = 'internal scratch']
  #allocation2 [shape = 'f32[32,64]{1,0:T(8,128)}', space=vmem, size = 0x4000, scoped, tag = 'scratch operand']
  %s0 = inlined_call_operand.vmem [shape: f32[2,32,64], index: 0, kind: input, shape index: {}]
  %s1 = inlined_call_operand.vmem [shape: f32[2,3,64], index: 1, kind: input, shape index: {}]
  %s2 = inlined_call_operand.vmem [shape: f32[2,1,256], index: 2, kind: input, shape index: {}]
  %s3 = inlined_call_operand.vmem [shape: bf16[2,64,192], index: 3, kind: input, shape index: {}]
  %s4 = inlined_call_operand.vmem [shape: bf16[2,64,64], index: 4, kind: input, shape index: {}]
  %s5 = inlined_call_operand.vmem [shape: bf16[2,64,256], index: 5, kind: input, shape index: {}]
  %s6 = inlined_call_operand.vmem [shape: bf16[2,256,64], index: 6, kind: input, shape index: {}]
  %s7 = inlined_call_operand.vmem [shape: f32[2,32,64], index: 7, kind: output, shape index: {}]
  %s8 = sld [smem:[#allocation0]]
  $region65: #{t3_for_finetuning_forward.2} parent=0
    _
  %s10 = ssub.s32 1, %s8
  %s11 = scalar_select 0, %s10, %s8
  loop: start=0, step=1, limit=6
  $region2: #{t3_for_finetuning_forward.2} parent=0 // loop_pre_header
    _
  $region3: #{t3_for_finetuning_forward.2} parent=0 // loop_header
    %s13 = sphi 0, %s17
    %p14 = scmp.ge.s32.totalorder %s13, 6
    %s20 = sphi 0, %s32
    %s21 = sphi 0, %s28
    %s22 = sphi 0, %s20
    %s23 = sphi 0, %s21
    %s24 = sphi 0, %s22
    %s25 = sphi 0, %s23
    %s35 = sphi 0, %s37
    %s38 = sphi 0, %s35
    %s39 = sphi 0, %s38
    %s55 = sphi 0, %s39
    %s61 = sphi 0, %s63
    %s64 = sphi 0, %s61
    %s65 = sphi 0, %s64
    %s81 = sphi 0, %s65
    %s87 = sphi 0, %s89
    %s90 = sphi 0, %s87
    %s91 = sphi 0, %s90
    %s107 = sphi 0, %s91
    %s113 = sphi 0, %s115
    %s116 = sphi 0, %s113
    %s117 = sphi 0, %s116
    %s133 = sphi 0, %s117
    %s139 = sphi 0, %s141
    %s142 = sphi 0, %s139
    %s143 = sphi 0, %s142
    %s159 = sphi 0, %s143
    %s165 = sphi 0, %s167
    %s168 = sphi 0, %s165
    %s169 = sphi 0, %s168
    %s185 = sphi 0, %s169
    %s191 = sphi 0, %s193
    %s194 = sphi 0, %s191
    %s195 = sphi 0, %s194
    %s211 = sphi 0, %s195
    %s217 = sphi 0, %s219
    %s220 = sphi 0, %s217
    %s221 = sphi 0, %s220
    %s237 = sphi 0, %s221
  $region4: #{t3_for_finetuning_forward.2} parent=0 // loop_header_branch
    %16 = sbr.rel (%p14) target = $region8
  $region5: #{t3_for_finetuning_forward.2} parent=0 // loop_body
    %s18 = ssub.s32 %s13, 1
    %s19 = ssub.s32 %s13, 2
    %s26 = sadd.s32 1, %s21
    %p27 = scmp.ge.s32.totalorder %s26, 2
    %s28 = scalar_select %p27, 0, %s26
    %s29 = sadd.s32 1, %s20
    %s30 = scalar_select %p27, %s29, %s20
    %p31 = scmp.ge.s32.totalorder %s30, 2
    %s32 = scalar_select %p31, 0, %s30
    %s33 = ssub.s32 %s20, %s32
    %p34 = scmp.eq.s32.totalorder %s33, 0
    %s36 = sadd.s32 %s35, 1
    %s37 = scalar_select %p34, %s35, %s36
    %p40 = pneg %p34
    %p41 = scmp.eq.s32.totalorder %s13, 3
    %p42 = por %p40, %p41
    %p43 = scmp.ne.s32.totalorder %s35, %s38
    %p44 = scmp.eq.s32.totalorder %s13, 0
    %p45 = por %p43, %p44
    %p46 = scmp.ne.s32.totalorder %s35, %s38
    %p47 = scmp.eq.s32.totalorder %s18, 3
    %p48 = por %p46, %p47
    %p49 = scmp.ne.s32.totalorder %s38, %s39
    %p50 = scmp.eq.s32.totalorder %s18, 0
    %p51 = por %p49, %p50
    %p52 = scmp.ne.s32.totalorder %s38, %s39
    %p53 = scmp.eq.s32.totalorder %s19, 3
    %p54 = por %p52, %p53
    %p56 = scmp.ne.s32.totalorder %s39, %s55
    %p57 = scmp.eq.s32.totalorder %s19, 0
    %p58 = por %p56, %p57
    %s59 = ssub.s32 %s21, %s28
    %p60 = scmp.eq.s32.totalorder %s59, 0
    %s62 = sadd.s32 %s61, 1
    %s63 = scalar_select %p60, %s61, %s62
    %p66 = pneg %p60
    %p67 = scmp.eq.s32.totalorder %s13, 3
    %p68 = por %p66, %p67
    %p69 = scmp.ne.s32.totalorder %s61, %s64
    %p70 = scmp.eq.s32.totalorder %s13, 0
    %p71 = por %p69, %p70
    %p72 = scmp.ne.s32.totalorder %s61, %s64
    %p73 = scmp.eq.s32.totalorder %s18, 3
    %p74 = por %p72, %p73
    %p75 = scmp.ne.s32.totalorder %s64, %s65
    %p76 = scmp.eq.s32.totalorder %s18, 0
    %p77 = por %p75, %p76
    %p78 = scmp.ne.s32.totalorder %s64, %s65
    %p79 = scmp.eq.s32.totalorder %s19, 3
    %p80 = por %p78, %p79
    %p82 = scmp.ne.s32.totalorder %s65, %s81
    %p83 = scmp.eq.s32.totalorder %s19, 0
    %p84 = por %p82, %p83
    %s85 = ssub.s32 %s21, %s28
    %p86 = scmp.eq.s32.totalorder %s85, 0
    %s88 = sadd.s32 %s87, 1
    %s89 = scalar_select %p86, %s87, %s88
    %p92 = pneg %p86
    %p93 = scmp.eq.s32.totalorder %s13, 3
    %p94 = por %p92, %p93
    %p95 = scmp.ne.s32.totalorder %s87, %s90
    %p96 = scmp.eq.s32.totalorder %s13, 0
    %p97 = por %p95, %p96
    %p98 = scmp.ne.s32.totalorder %s87, %s90
    %p99 = scmp.eq.s32.totalorder %s18, 3
    %p100 = por %p98, %p99
    %p101 = scmp.ne.s32.totalorder %s90, %s91
    %p102 = scmp.eq.s32.totalorder %s18, 0
    %p103 = por %p101, %p102
    %p104 = scmp.ne.s32.totalorder %s90, %s91
    %p105 = scmp.eq.s32.totalorder %s19, 3
    %p106 = por %p104, %p105
    %p108 = scmp.ne.s32.totalorder %s91, %s107
    %p109 = scmp.eq.s32.totalorder %s19, 0
    %p110 = por %p108, %p109
    %s111 = ssub.s32 %s21, %s28
    %p112 = scmp.eq.s32.totalorder %s111, 0
    %s114 = sadd.s32 %s113, 1
    %s115 = scalar_select %p112, %s113, %s114
    %p118 = pneg %p112
    %p119 = scmp.eq.s32.totalorder %s13, 3
    %p120 = por %p118, %p119
    %p121 = scmp.ne.s32.totalorder %s113, %s116
    %p122 = scmp.eq.s32.totalorder %s13, 0
    %p123 = por %p121, %p122
    %p124 = scmp.ne.s32.totalorder %s113, %s116
    %p125 = scmp.eq.s32.totalorder %s18, 3
    %p126 = por %p124, %p125
    %p127 = scmp.ne.s32.totalorder %s116, %s117
    %p128 = scmp.eq.s32.totalorder %s18, 0
    %p129 = por %p127, %p128
    %p130 = scmp.ne.s32.totalorder %s116, %s117
    %p131 = scmp.eq.s32.totalorder %s19, 3
    %p132 = por %p130, %p131
    %p134 = scmp.ne.s32.totalorder %s117, %s133
    %p135 = scmp.eq.s32.totalorder %s19, 0
    %p136 = por %p134, %p135
    %s137 = ssub.s32 %s21, %s28
    %p138 = scmp.eq.s32.totalorder %s137, 0
    %s140 = sadd.s32 %s139, 1
    %s141 = scalar_select %p138, %s139, %s140
    %p144 = pneg %p138
    %p145 = scmp.eq.s32.totalorder %s13, 3
    %p146 = por %p144, %p145
    %p147 = scmp.ne.s32.totalorder %s139, %s142
    %p148 = scmp.eq.s32.totalorder %s13, 0
    %p149 = por %p147, %p148
    %p150 = scmp.ne.s32.totalorder %s139, %s142
    %p151 = scmp.eq.s32.totalorder %s18, 3
    %p152 = por %p150, %p151
    %p153 = scmp.ne.s32.totalorder %s142, %s143
    %p154 = scmp.eq.s32.totalorder %s18, 0
    %p155 = por %p153, %p154
    %p156 = scmp.ne.s32.totalorder %s142, %s143
    %p157 = scmp.eq.s32.totalorder %s19, 3
    %p158 = por %p156, %p157
    %p160 = scmp.ne.s32.totalorder %s143, %s159
    %p161 = scmp.eq.s32.totalorder %s19, 0
    %p162 = por %p160, %p161
    %s163 = ssub.s32 %s21, %s28
    %p164 = scmp.eq.s32.totalorder %s163, 0
    %s166 = sadd.s32 %s165, 1
    %s167 = scalar_select %p164, %s165, %s166
    %p170 = pneg %p164
    %p171 = scmp.eq.s32.totalorder %s13, 3
    %p172 = por %p170, %p171
    %p173 = scmp.ne.s32.totalorder %s165, %s168
    %p174 = scmp.eq.s32.totalorder %s13, 0
    %p175 = por %p173, %p174
    %p176 = scmp.ne.s32.totalorder %s165, %s168
    %p177 = scmp.eq.s32.totalorder %s18, 3
    %p178 = por %p176, %p177
    %p179 = scmp.ne.s32.totalorder %s168, %s169
    %p180 = scmp.eq.s32.totalorder %s18, 0
    %p181 = por %p179, %p180
    %p182 = scmp.ne.s32.totalorder %s168, %s169
    %p183 = scmp.eq.s32.totalorder %s19, 3
    %p184 = por %p182, %p183
    %p186 = scmp.ne.s32.totalorder %s169, %s185
    %p187 = scmp.eq.s32.totalorder %s19, 0
    %p188 = por %p186, %p187
    %s189 = ssub.s32 %s21, %s28
    %p190 = scmp.eq.s32.totalorder %s189, 0
    %s192 = sadd.s32 %s191, 1
    %s193 = scalar_select %p190, %s191, %s192
    %p196 = pneg %p190
    %p197 = scmp.eq.s32.totalorder %s13, 3
    %p198 = por %p196, %p197
    %p199 = scmp.ne.s32.totalorder %s191, %s194
    %p200 = scmp.eq.s32.totalorder %s13, 0
    %p201 = por %p199, %p200
    %p202 = scmp.ne.s32.totalorder %s191, %s194
    %p203 = scmp.eq.s32.totalorder %s18, 3
    %p204 = por %p202, %p203
    %p205 = scmp.ne.s32.totalorder %s194, %s195
    %p206 = scmp.eq.s32.totalorder %s18, 0
    %p207 = por %p205, %p206
    %p208 = scmp.ne.s32.totalorder %s194, %s195
    %p209 = scmp.eq.s32.totalorder %s19, 3
    %p210 = por %p208, %p209
    %p212 = scmp.ne.s32.totalorder %s195, %s211
    %p213 = scmp.eq.s32.totalorder %s19, 0
    %p214 = por %p212, %p213
    %s215 = ssub.s32 %s20, %s32
    %p216 = scmp.eq.s32.totalorder %s215, 0
    %s218 = sadd.s32 %s217, 1
    %s219 = scalar_select %p216, %s217, %s218
    %p222 = pneg %p216
    %p223 = scmp.eq.s32.totalorder %s13, 3
    %p224 = por %p222, %p223
    %p225 = scmp.ne.s32.totalorder %s217, %s220
    %p226 = scmp.eq.s32.totalorder %s13, 0
    %p227 = por %p225, %p226
    %p228 = scmp.ne.s32.totalorder %s217, %s220
    %p229 = scmp.eq.s32.totalorder %s18, 3
    %p230 = por %p228, %p229
    %p231 = scmp.ne.s32.totalorder %s220, %s221
    %p232 = scmp.eq.s32.totalorder %s18, 0
    %p233 = por %p231, %p232
    %p234 = scmp.ne.s32.totalorder %s220, %s221
    %p235 = scmp.eq.s32.totalorder %s19, 3
    %p236 = por %p234, %p235
    %p238 = scmp.ne.s32.totalorder %s221, %s237
    %p239 = scmp.eq.s32.totalorder %s19, 0
    %p240 = por %p238, %p239
    %p241 = scmp.le.s32.totalorder 1, %s13
    %p242 = scmp.lt.s32.totalorder %s13, 5
    %p243 = pnand %p241, %p242
    %p244 = pneg %p243
    // Predicated region
    $region9: #{t3_for_finetuning_forward.2} parent=5 // pred_check
      _
    $region10: #{t3_for_finetuning_forward.2} parent=5 // pred_check_branch
      %246 = sbr.rel (%p243) target = $region12
    $region11: #{t3_for_finetuning_forward.2} parent=5 // pred_region
      %s247 = ssub.s32 %s13, 1
    $region12: #{t3_for_finetuning_forward.2} parent=5 // pred_fallthru
      _
    %p248 = scmp.lt.s32.totalorder %s13, 4
    // Predicated region
    $region13: #{t3_for_finetuning_forward.2} parent=5 // pred_check
      %p249 = pneg %p248
    $region14: #{t3_for_finetuning_forward.2} parent=5 // pred_check_branch
      %251 = sbr.rel (%p249) target = $region16
    $region15: #{t3_for_finetuning_forward.2} parent=5 // pred_region
      // Predicated region
      $region17: #{t3_for_finetuning_forward.2} parent=15 // pred_check
        %p252 = pneg %p45
      $region18: #{t3_for_finetuning_forward.2} parent=15 // pred_check_branch
        %254 = sbr.rel (%p252) target = $region20
      $region19: #{t3_for_finetuning_forward.2} parent=15 // pred_region
        %p255 = scmp.lt.s32.totalorder %s20, 1
        %s256 = scalar_select %p255, %s20, 1
        %s257 = smul.addr %s256, 4
        %s258 = smul.addr %s257, 8
        %s259 = scalar_lea.vmem %s0, %s258
      $region20: #{t3_for_finetuning_forward.2} parent=15 // pred_fallthru
        _
      // Predicated region
      $region21: #{t3_for_finetuning_forward.2} parent=15 // pred_check
        %p260 = pneg %p71
      $region22: #{t3_for_finetuning_forward.2} parent=15 // pred_check_branch
        %262 = sbr.rel (%p260) target = $region24
      $region23: #{t3_for_finetuning_forward.2} parent=15 // pred_region
        %p263 = scmp.lt.s32.totalorder %s21, 1
        %s264 = scalar_select %p263, %s21, 1
        %s265 = smul.addr %s264, 4
        %s266 = scalar_lea.vmem %s1, %s265
      $region24: #{t3_for_finetuning_forward.2} parent=15 // pred_fallthru
        _
      // Predicated region
      $region25: #{t3_for_finetuning_forward.2} parent=15 // pred_check
        %p267 = pneg %p97
      $region26: #{t3_for_finetuning_forward.2} parent=15 // pred_check_branch
        %269 = sbr.rel (%p267) target = $region28
      $region27: #{t3_for_finetuning_forward.2} parent=15 // pred_region
        %p270 = scmp.lt.s32.totalorder %s21, 1
        %s271 = scalar_select %p270, %s21, 1
        %s272 = smul.addr %s271, 2
        %s273 = scalar_lea.vmem %s2, %s272
      $region28: #{t3_for_finetuning_forward.2} parent=15 // pred_fallthru
        _
      // Predicated region
      $region29: #{t3_for_finetuning_forward.2} parent=15 // pred_check
        %p274 = pneg %p123
      $region30: #{t3_for_finetuning_forward.2} parent=15 // pred_check_branch
        %276 = sbr.rel (%p274) target = $region32
      $region31: #{t3_for_finetuning_forward.2} parent=15 // pred_region
        %p277 = scmp.lt.s32.totalorder %s21, 1
        %s278 = scalar_select %p277, %s21, 1
        %s279 = smul.addr %s278, 16
        %s280 = smul.addr %s279, 4
        %s281 = scalar_lea.vmem %s3, %s280
      $region32: #{t3_for_finetuning_forward.2} parent=15 // pred_fallthru
        _
      // Predicated region
      $region33: #{t3_for_finetuning_forward.2} parent=15 // pred_check
        %p282 = pneg %p149
      $region34: #{t3_for_finetuning_forward.2} parent=15 // pred_check_branch
        %284 = sbr.rel (%p282) target = $region36
      $region35: #{t3_for_finetuning_forward.2} parent=15 // pred_region
        %p285 = scmp.lt.s32.totalorder %s21, 1
        %s286 = scalar_select %p285, %s21, 1
        %s287 = smul.addr %s286, 8
        %s288 = smul.addr %s287, 4
        %s289 = scalar_lea.vmem %s4, %s288
      $region36: #{t3_for_finetuning_forward.2} parent=15 // pred_fallthru
        _
      // Predicated region
      $region37: #{t3_for_finetuning_forward.2} parent=15 // pred_check
        %p290 = pneg %p175
      $region38: #{t3_for_finetuning_forward.2} parent=15 // pred_check_branch
        %292 = sbr.rel (%p290) target = $region40
      $region39: #{t3_for_finetuning_forward.2} parent=15 // pred_region
        %p293 = scmp.lt.s32.totalorder %s21, 1
        %s294 = scalar_select %p293, %s21, 1
        %s295 = smul.addr %s294, 16
        %s296 = smul.addr %s295, 4
        %s297 = scalar_lea.vmem %s5, %s296
      $region40: #{t3_for_finetuning_forward.2} parent=15 // pred_fallthru
        _
      // Predicated region
      $region41: #{t3_for_finetuning_forward.2} parent=15 // pred_check
        %p298 = pneg %p201
      $region42: #{t3_for_finetuning_forward.2} parent=15 // pred_check_branch
        %300 = sbr.rel (%p298) target = $region44
      $region43: #{t3_for_finetuning_forward.2} parent=15 // pred_region
        %p301 = scmp.lt.s32.totalorder %s21, 1
        %s302 = scalar_select %p301, %s21, 1
        %s303 = smul.addr %s302, 32
        %s304 = smul.addr %s303, 4
        %s305 = scalar_lea.vmem %s6, %s304
      $region44: #{t3_for_finetuning_forward.2} parent=15 // pred_fallthru
        _
    $region16: #{t3_for_finetuning_forward.2} parent=5 // pred_fallthru
      _
    %p306 = scmp.le.s32.totalorder 1, %s13
    %p307 = scmp.lt.s32.totalorder %s13, 5
    %p308 = pnand %p306, %p307
    %p309 = pneg %p308
    // Predicated region
    $region45: #{t3_for_finetuning_forward.2} parent=5 // pred_check
      _
    $region46: #{t3_for_finetuning_forward.2} parent=5 // pred_check_branch
      %311 = sbr.rel (%p308) target = $region48
    $region47: #{t3_for_finetuning_forward.2} parent=5 // pred_region
      %s312 = ssub.s32 %s13, 1
      %p313 = scmp.lt.s32.totalorder %s22, 1
      %s314 = scalar_select %p313, %s22, 1
      %s315 = smul.addr %s314, 4
      %s316 = smul.addr %s315, 8
      %s317 = scalar_lea.vmem %s0, %s316
      %p318 = pneg %p51
      %p319 = pneg %p48
      %p320 = scmp.lt.s32.totalorder %s23, 1
      %s321 = scalar_select %p320, %s23, 1
      %s322 = smul.addr %s321, 4
      %s323 = scalar_lea.vmem %s1, %s322
      %p324 = pneg %p77
      %p325 = pneg %p74
      %p326 = scmp.lt.s32.totalorder %s23, 1
      %s327 = scalar_select %p326, %s23, 1
      %s328 = smul.addr %s327, 2
      %s329 = scalar_lea.vmem %s2, %s328
      %p330 = pneg %p103
      %p331 = pneg %p100
      %p332 = scmp.lt.s32.totalorder %s23, 1
      %s333 = scalar_select %p332, %s23, 1
      %s334 = smul.addr %s333, 16
      %s335 = smul.addr %s334, 4
      %s336 = scalar_lea.vmem %s3, %s335
      %p337 = pneg %p129
      %p338 = pneg %p126
      %p339 = scmp.lt.s32.totalorder %s23, 1
      %s340 = scalar_select %p339, %s23, 1
      %s341 = smul.addr %s340, 8
      %s342 = smul.addr %s341, 4
      %s343 = scalar_lea.vmem %s4, %s342
      %p344 = pneg %p155
      %p345 = pneg %p152
      %p346 = scmp.lt.s32.totalorder %s23, 1
      %s347 = scalar_select %p346, %s23, 1
      %s348 = smul.addr %s347, 16
      %s349 = smul.addr %s348, 4
      %s350 = scalar_lea.vmem %s5, %s349
      %p351 = pneg %p181
      %p352 = pneg %p178
      %p353 = scmp.lt.s32.totalorder %s23, 1
      %s354 = scalar_select %p353, %s23, 1
      %s355 = smul.addr %s354, 32
      %s356 = smul.addr %s355, 4
      %s357 = scalar_lea.vmem %s6, %s356
      %p358 = pneg %p207
      %p359 = pneg %p204
      %p360 = pneg %p233
      %p361 = pneg %p230
      %p362 = scmp.lt.s32.totalorder %s22, 1
      %s363 = scalar_select %p362, %s22, 1
      %s364 = smul.addr %s363, 4
      %s365 = smul.addr %s364, 8
      %s366 = scalar_lea.vmem %s7, %s365
      %p367 = scmp.lt.s32.totalorder %s22, 1
      %s368 = scalar_select %p367, %s22, 1
      %s369 = smul.addr %s368, 4
      %s370 = smul.addr %s369, 8
      %s371 = scalar_lea.vmem %s0, %s370
      %p372 = scmp.lt.s32.totalorder %s23, 1
      %s373 = scalar_select %p372, %s23, 1
      %s374 = smul.addr %s373, 4
      %s375 = scalar_lea.vmem %s1, %s374
      %p376 = scmp.lt.s32.totalorder %s23, 1
      %s377 = scalar_select %p376, %s23, 1
      %s378 = smul.addr %s377, 2
      %s379 = scalar_lea.vmem %s2, %s378
      %p380 = scmp.lt.s32.totalorder %s23, 1
      %s381 = scalar_select %p380, %s23, 1
      %s382 = smul.addr %s381, 16
      %s383 = smul.addr %s382, 4
      %s384 = scalar_lea.vmem %s3, %s383
      %p385 = scmp.lt.s32.totalorder %s23, 1
      %s386 = scalar_select %p385, %s23, 1
      %s387 = smul.addr %s386, 8
      %s388 = smul.addr %s387, 4
      %s389 = scalar_lea.vmem %s4, %s388
      %p390 = scmp.lt.s32.totalorder %s23, 1
      %s391 = scalar_select %p390, %s23, 1
      %s392 = smul.addr %s391, 16
      %s393 = smul.addr %s392, 4
      %s394 = scalar_lea.vmem %s5, %s393
      %p395 = scmp.lt.s32.totalorder %s23, 1
      %s396 = scalar_select %p395, %s23, 1
      %s397 = smul.addr %s396, 32
      %s398 = smul.addr %s397, 4
      %s399 = scalar_lea.vmem %s6, %s398
      %p400 = scmp.lt.s32.totalorder %s22, 1
      %s401 = scalar_select %p400, %s22, 1
      %s402 = smul.addr %s401, 4
      %s403 = smul.addr %s402, 8
      %s404 = scalar_lea.vmem %s7, %s403
      %p406 = scmp.eq.s32.totalorder %s23, 0
      // Predicated region
      $region49: #{t3_for_finetuning_forward.2} parent=47 // pred_check
        %p407 = pneg %p406
      $region50: #{t3_for_finetuning_forward.2} parent=47 // pred_check_branch
        %409 = sbr.rel (%p407) target = $region52
      $region51: #{t3_for_finetuning_forward.2} parent=47 // pred_region
        %v410 = vld [vmem:[%s371] sm:$0xff]
        %v411 = vld [vmem:[%s371 + $0x8] sm:$0xff]
        %v412 = vld [vmem:[%s371 + $0x10] sm:$0xff]
        %v413 = vld [vmem:[%s371 + $0x18] sm:$0xff]
        %vm414 = vcmask 523264
        %415 = vst.msk [vmem:[%s404] sm:$0xff] %vm414, %v410
        %416 = vst.msk [vmem:[%s404 + $0x8] sm:$0xff] %vm414, %v411
        %417 = vst.msk [vmem:[%s404 + $0x10] sm:$0xff] %vm414, %v412
        %418 = vst.msk [vmem:[%s404 + $0x18] sm:$0xff] %vm414, %v413
      $region52: #{t3_for_finetuning_forward.2} parent=47 // pred_fallthru
        _
      %v419 = vld [vmem:[%s404] sm:$0xff]
      %v420 = vld [vmem:[%s404 + $0x8] sm:$0xff]
      %v421 = vld [vmem:[%s404 + $0x10] sm:$0xff]
      %v422 = vld [vmem:[%s404 + $0x18] sm:$0xff]
      %v423 = vld [vmem:[%s375] sm:$0x7]
      %v424 = vld [vmem:[%s379] sm:$0x3]
      %v425 = vmul.f32 %v419, %v419
      %v426 = vmul.f32 %v420, %v420
      %v427 = vmul.f32 %v421, %v421
      %v428 = vmul.f32 %v422, %v422
      %vm429 = vcmask 523264
      %v430 = vsel %vm429, %v425, 0.0
      %431 = vadd.xlane.f32.xlu0 %v430
      %v432 = vpop.xlane.xlu0 %431
      %v433 = vsel %vm429, %v426, 0.0
      %434 = vadd.xlane.f32.xlu0 %v433
      %v435 = vpop.xlane.xlu0 %434
      %v436 = vsel %vm429, %v427, 0.0
      %437 = vadd.xlane.f32.xlu0 %v436
      %v438 = vpop.xlane.xlu0 %437
      %v439 = vsel %vm429, %v428, 0.0
      %440 = vadd.xlane.f32.xlu0 %v439
      %v441 = vpop.xlane.xlu0 %440
      %v442 = vrcp.pop 64.0
      %v443 = vmul.f32 %v432, %v442
      %v444 = vmul.f32 %v435, %v442
      %v445 = vmul.f32 %v438, %v442
      %v446 = vmul.f32 %v441, %v442
      %v447 = vadd.f32 %v443, 1e-06
      %v448 = vadd.f32 %v444, 1e-06
      %v449 = vadd.f32 %v445, 1e-06
      %v450 = vadd.f32 %v446, 1e-06
      %v451 = vrsqrt.pop %v447
      %v452 = vrsqrt.pop %v448
      %v453 = vrsqrt.pop %v449
      %v454 = vrsqrt.pop %v450
      %v455 = vmul.f32 %v419, %v451
      %v456 = vmul.f32 %v420, %v452
      %v457 = vmul.f32 %v421, %v453
      %v458 = vmul.f32 %v422, %v454
      %v459 = vlaneseq
      %v460 = vshrl.u32 %v459, 7
      %v461 = vsub.s32 0, %v460
      %v462 = vrot.slane %v423, %v461
      %v463 = vmul.f32 %v455, %v462
      %v464 = vmul.f32 %v456, %v462
      %v465 = vmul.f32 %v457, %v462
      %v466 = vmul.f32 %v458, %v462
      %v467 = vpack.c.bf16 %v464, %v463
      %v468 = vpack.c.bf16 %v466, %v465
      %v469 = vld [vmem:[%s384] sm:$0xff]
      %v470 = vld [vmem:[%s384 + $0x8] sm:$0xff]
      %v471 = vld [vmem:[%s384 + $0x10] sm:$0xff]
      %v472 = vld [vmem:[%s384 + $0x18] sm:$0xff]
      %v473 = vld [vmem:[%s384 + $0x20] sm:$0xff]
      %v474 = vld [vmem:[%s384 + $0x28] sm:$0xff]
      %v475 = vld [vmem:[%s384 + $0x30] sm:$0xff]
      %v476 = vld [vmem:[%s384 + $0x38] sm:$0xff]
      %v485 = vunpack.c.l.b16 %v469
      %v486 = vunpack.c.h.b16 %v469
      %v487 = vunpack.c.l.b16 %v470
      %v488 = vunpack.c.h.b16 %v470
      %v489 = vunpack.c.l.b16 %v471
      %v490 = vunpack.c.h.b16 %v471
      %v491 = vunpack.c.l.b16 %v472
      %v492 = vunpack.c.h.b16 %v472
      %v493 = vunpack.c.l.b16 %v473
      %v494 = vunpack.c.h.b16 %v473
      %v495 = vunpack.c.l.b16 %v474
      %v496 = vunpack.c.h.b16 %v474
      %v497 = vunpack.c.l.b16 %v475
      %v498 = vunpack.c.h.b16 %v475
      %v499 = vunpack.c.l.b16 %v476
      %v500 = vunpack.c.h.b16 %v476
      %v501 = vpack.c.b16 %v487, %v485
      %v502 = vpack.c.b16 %v488, %v486
      %v503 = vpack.c.b16 %v491, %v489
      %v504 = vpack.c.b16 %v492, %v490
      %v505 = vpack.c.b16 %v495, %v493
      %v506 = vpack.c.b16 %v496, %v494
      %v507 = vpack.c.b16 %v499, %v497
      %v508 = vpack.c.b16 %v500, %v498
      %v518 = vsel %vm429, %v467, 0
      %v521 = vsel %vm429, %v468, 0
      %523 = vmatprep.subr.bf16.mxu0 %v502
      %524 = vmatpush1.bf16.msra.mxu0 %v501
      %525 = vmatprep.subr.bf16.mxu0 %v504
      %526 = vmatpush1.bf16.msra.mxu0 %v503
      %527 = vmatprep.subr.bf16.mxu0 %v506
      %528 = vmatpush1.bf16.msra.mxu0 %v505
      %529 = vmatprep.subr.bf16.mxu0 %v508
      %530 = vmatpush1.bf16.msra.mxu0 %v507
      %531 = vmatprep.subr.bf16.mxu0 0
      %532 = vmatpush1.bf16.msra.mxu0 0
      %533 = vmatprep.subr.bf16.mxu0 0
      %534 = vmatpush1.bf16.msra.mxu0 0
      %535 = vmatprep.subr.bf16.mxu0 0
      %536 = vmatpush1.bf16.msra.mxu0 0
      %537 = vmatprep.subr.bf16.mxu0 0
      %538 = vmatpush1.bf16.msra.mxu0 0
      %539 = vmatprep.subr.bf16.mxu0 0
      %540 = vmatpush1.bf16.msra.mxu0 0
      %541 = vmatprep.subr.bf16.mxu0 0
      %542 = vmatpush1.bf16.msra.mxu0 0
      %543 = vmatprep.subr.bf16.mxu0 0
      %544 = vmatpush1.bf16.msra.mxu0 0
      %545 = vmatprep.subr.bf16.mxu0 0
      %546 = vmatpush1.bf16.msra.mxu0 0
      %547 = vmatprep.subr.bf16.mxu0 0
      %548 = vmatpush1.bf16.msra.mxu0 0
      %549 = vmatprep.subr.bf16.mxu0 0
      %550 = vmatpush1.bf16.msra.mxu0 0
      %551 = vmatprep.subr.bf16.mxu0 0
      %552 = vmatpush1.bf16.msra.mxu0 0
      %553 = vmatprep.subr.bf16.mxu0 0
      %554 = vmatpush1.bf16.msra.mxu0 0
      %555 = vmatprep.mubr.bf16.mxu0 0
      %556 = vmatmul.mubr.bf16.gmra.mrb[0].mxu0 %v518
      %v557 = vpop.f32.mrb[0].mxu0
      %v558 = vadd.f32 0.0, %v557
      %v559 = vpop.f32.mrb[0].mxu0
      %v560 = vadd.f32 0.0, %v559
      %v561 = vpop.f32.mrb[0].mxu0
      %v562 = vadd.f32 0.0, %v561
      %v563 = vpop.f32.mrb[0].mxu0
      %v564 = vadd.f32 0.0, %v563
      %565 = vmatprep.mubr.bf16.mxu0 0
      %566 = vmatmul.mubr.bf16.gmra.mrb[0].mxu0 %v521
      %v567 = vpop.f32.mrb[0].mxu0
      %v568 = vadd.f32 0.0, %v567
      %v569 = vpop.f32.mrb[0].mxu0
      %v570 = vadd.f32 0.0, %v569
      %v571 = vpop.f32.mrb[0].mxu0
      %v572 = vadd.f32 0.0, %v571
      %v573 = vpop.f32.mrb[0].mxu0
      %v574 = vadd.f32 0.0, %v573
      %575 = vdwg.mxu0
      %v576 = vpack.c.bf16 %v562, %v558
      %v577 = vpack.c.bf16 %v564, %v560
      %v578 = vpack.c.bf16 %v572, %v568
      %v579 = vpack.c.bf16 %v574, %v570
      %v580 = vlaneseq
      %v581 = vshrl.u32 %v580, 7
      %v582 = vadd.s32 %v581, 8
      %v583 = vadd.s32 %v581, 16
      %v584 = vadd.s32 %v581, 24
      %v585 = vlaneseq
      %v586 = vand.u32 %v585, 127
      %vm587 = vcmp.le.s32.totalorder %v586, %v581
      %vm588 = vcmp.le.s32.totalorder %v586, %v582
      %vm589 = vcmp.le.s32.totalorder %v586, %v583
      %vm590 = vcmp.le.s32.totalorder %v586, %v584
      %593 = vrot.lane.b32.xlu0 %v576, 64
      %v594 = vpop.permute.xlu0 %593
      %595 = vrot.lane.b32.xlu0 %v578, 64
      %v596 = vpop.permute.xlu0 %595
      %vm597 = vcmask 261120
      %v599 = vsel %vm597, %v576, 0
      %v602 = vsel %vm597, %v578, 0
      %v605 = vsel %vm597, %v594, 0
      %v608 = vsel %vm597, %v596, 0
      %610 = vmatprep.subr.bf16.mxu0 0
      %611 = vmatpush1.bf16.xpose.msra.mxu0 %v605
      %612 = vmatprep.subr.bf16.mxu0 0
      %613 = vmatpush1.bf16.xpose.msra.mxu0 %v608
      %614 = vmatprep.subr.bf16.mxu0 0
      %615 = vmatpush1.bf16.xpose.msra.mxu0 0
      %616 = vmatprep.subr.bf16.mxu0 0
      %617 = vmatpush1.bf16.xpose.msra.mxu0 0
      %618 = vmatprep.subr.bf16.mxu0 0
      %619 = vmatpush1.bf16.xpose.msra.mxu0 0
      %620 = vmatprep.subr.bf16.mxu0 0
      %621 = vmatpush1.bf16.xpose.msra.mxu0 0
      %622 = vmatprep.subr.bf16.mxu0 0
      %623 = vmatpush1.bf16.xpose.msra.mxu0 0
      %624 = vmatprep.subr.bf16.mxu0 0
      %625 = vmatpush1.bf16.xpose.msra.mxu0 0
      %626 = vmatprep.subr.bf16.mxu0 0
      %627 = vmatpush1.bf16.xpose.msra.mxu0 0
      %628 = vmatprep.subr.bf16.mxu0 0
      %629 = vmatpush1.bf16.xpose.msra.mxu0 0
      %630 = vmatprep.subr.bf16.mxu0 0
      %631 = vmatpush1.bf16.xpose.msra.mxu0 0
      %632 = vmatprep.subr.bf16.mxu0 0
      %633 = vmatpush1.bf16.xpose.msra.mxu0 0
      %634 = vmatprep.subr.bf16.mxu0 0
      %635 = vmatpush1.bf16.xpose.msra.mxu0 0
      %636 = vmatprep.subr.bf16.mxu0 0
      %637 = vmatpush1.bf16.xpose.msra.mxu0 0
      %638 = vmatprep.subr.bf16.mxu0 0
      %639 = vmatpush1.bf16.xpose.msra.mxu0 0
      %640 = vmatprep.subr.bf16.mxu0 0
      %641 = vmatpush1.bf16.xpose.msra.mxu0 0
      %642 = vmatprep.mubr.bf16.mxu0 0
      %643 = vmatmul.mubr.bf16.gmra.mrb[0].mxu0 %v599
      %v644 = vpop.f32.mrb[0].mxu0
      %v645 = vadd.f32 0.0, %v644
      %v646 = vpop.f32.mrb[0].mxu0
      %v647 = vpop.f32.mrb[0].mxu0
      %v648 = vadd.f32 0.0, %v647
      %v649 = vpop.f32.mrb[0].mxu0
      %650 = vmatprep.mubr.bf16.mxu0 0
      %651 = vmatmul.mubr.bf16.gmra.mrb[0].mxu0 %v602
      %v652 = vpop.f32.mrb[0].mxu0
      %v653 = vadd.f32 0.0, %v652
      %v654 = vpop.f32.mrb[0].mxu0
      %v655 = vpop.f32.mrb[0].mxu0
      %v656 = vadd.f32 0.0, %v655
      %v657 = vpop.f32.mrb[0].mxu0
      %658 = vdwg.mxu0
      %v659 = vmul.f32 %v645, 0.17677669
      %v660 = vmul.f32 %v648, 0.17677669
      %v661 = vmul.f32 %v653, 0.17677669
      %v662 = vmul.f32 %v656, 0.17677669
      %v663 = vsel %vm587, %v659, -1e+30
      %v664 = vsel %vm588, %v660, -1e+30
      %v665 = vsel %vm589, %v661, -1e+30
      %v666 = vsel %vm590, %v662, -1e+30
      %v667 = vsel %vm597, %v663, -inf
      %668 = vmax.xlane.f32.xlu0 %v667
      %v669 = vpop.xlane.xlu0 %668
      %v670 = vsel %vm597, %v664, -inf
      %671 = vmax.xlane.f32.xlu0 %v670
      %v672 = vpop.xlane.xlu0 %671
      %v673 = vsel %vm597, %v665, -inf
      %674 = vmax.xlane.f32.xlu0 %v673
      %v675 = vpop.xlane.xlu0 %674
      %v676 = vsel %vm597, %v666, -inf
      %677 = vmax.xlane.f32.xlu0 %v676
      %v678 = vpop.xlane.xlu0 %677
      %v679 = vsub.f32 %v663, %v669
      %v680 = vsub.f32 %v664, %v672
      %v681 = vsub.f32 %v665, %v675
      %v682 = vsub.f32 %v666, %v678
      %v683 = vmul.f32 %v679, 1.442695
      %v684 = vpow.pop %v683
      %v685 = vmul.f32 %v680, 1.442695
      %v686 = vpow.pop %v685
      %v687 = vmul.f32 %v681, 1.442695
      %v688 = vpow.pop %v687
      %v689 = vmul.f32 %v682, 1.442695
      %v690 = vpow.pop %v689
      %v691 = vsel %vm597, %v684, 0.0
      %692 = vadd.xlane.f32.xlu0 %v691
      %v693 = vpop.xlane.xlu0 %692
      %v694 = vsel %vm597, %v686, 0.0
      %695 = vadd.xlane.f32.xlu0 %v694
      %v696 = vpop.xlane.xlu0 %695
      %v697 = vsel %vm597, %v688, 0.0
      %698 = vadd.xlane.f32.xlu0 %v697
      %v699 = vpop.xlane.xlu0 %698
      %v700 = vsel %vm597, %v690, 0.0
      %701 = vadd.xlane.f32.xlu0 %v700
      %v702 = vpop.xlane.xlu0 %701
      %v703 = vpack.c.bf16 %v686, %v684
      %v704 = vpack.c.bf16 %v690, %v688
      %v706 = vsel %vm597, %v703, 0
      %v709 = vsel %vm597, %v704, 0
      %711 = vmatprep.subr.bf16.mxu0 0
      %712 = vmatpush1.bf16.msra.mxu0 %v577
      %713 = vmatprep.subr.bf16.mxu0 0
      %714 = vmatpush1.bf16.msra.mxu0 %v579
      %715 = vmatprep.subr.bf16.mxu0 0
      %716 = vmatpush1.bf16.msra.mxu0 0
      %717 = vmatprep.subr.bf16.mxu0 0
      %718 = vmatpush1.bf16.msra.mxu0 0
      %719 = vmatprep.subr.bf16.mxu0 0
      %720 = vmatpush1.bf16.msra.mxu0 0
      %721 = vmatprep.subr.bf16.mxu0 0
      %722 = vmatpush1.bf16.msra.mxu0 0
      %723 = vmatprep.subr.bf16.mxu0 0
      %724 = vmatpush1.bf16.msra.mxu0 0
      %725 = vmatprep.subr.bf16.mxu0 0
      %726 = vmatpush1.bf16.msra.mxu0 0
      %727 = vmatprep.subr.bf16.mxu0 0
      %728 = vmatpush1.bf16.msra.mxu0 0
      %729 = vmatprep.subr.bf16.mxu0 0
      %730 = vmatpush1.bf16.msra.mxu0 0
      %731 = vmatprep.subr.bf16.mxu0 0
      %732 = vmatpush1.bf16.msra.mxu0 0
      %733 = vmatprep.subr.bf16.mxu0 0
      %734 = vmatpush1.bf16.msra.mxu0 0
      %735 = vmatprep.subr.bf16.mxu0 0
      %736 = vmatpush1.bf16.msra.mxu0 0
      %737 = vmatprep.subr.bf16.mxu0 0
      %738 = vmatpush1.bf16.msra.mxu0 0
      %739 = vmatprep.subr.bf16.mxu0 0
      %740 = vmatpush1.bf16.msra.mxu0 0
      %741 = vmatprep.subr.bf16.mxu0 0
      %742 = vmatpush1.bf16.msra.mxu0 0
      %743 = vmatprep.mubr.bf16.mxu0 0
      %744 = vmatmul.mubr.bf16.gmra.mrb[0].mxu0 %v706
      %v745 = vpop.f32.mrb[0].mxu0
      %v746 = vadd.f32 0.0, %v745
      %v747 = vpop.f32.mrb[0].mxu0
      %v748 = vpop.f32.mrb[0].mxu0
      %v749 = vadd.f32 0.0, %v748
      %v750 = vpop.f32.mrb[0].mxu0
      %751 = vmatprep.mubr.bf16.mxu0 0
      %752 = vmatmul.mubr.bf16.gmra.mrb[0].mxu0 %v709
      %v753 = vpop.f32.mrb[0].mxu0
      %v754 = vadd.f32 0.0, %v753
      %v755 = vpop.f32.mrb[0].mxu0
      %v756 = vpop.f32.mrb[0].mxu0
      %v757 = vadd.f32 0.0, %v756
      %v758 = vpop.f32.mrb[0].mxu0
      %759 = vdwg.mxu0
      %v760 = vrcp.pop %v693
      %v761 = vrcp.pop %v696
      %v762 = vrcp.pop %v699
      %v763 = vrcp.pop %v702
      %v764 = vmul.f32 %v746, %v760
      %v765 = vmul.f32 %v749, %v761
      %v766 = vmul.f32 %v754, %v762
      %v767 = vmul.f32 %v757, %v763
      %768 = vst.msk [vmem:[#allocation2] sm:$0xff] %vm597, %v764
      %769 = vst.msk [vmem:[#allocation2 + $0x8] sm:$0xff] %vm597, %v765
      %770 = vst.msk [vmem:[#allocation2 + $0x10] sm:$0xff] %vm597, %v766
      %771 = vst.msk [vmem:[#allocation2 + $0x18] sm:$0xff] %vm597, %v767
      %772 = vrot.lane.b32.xlu0 %v576, 96
      %v773 = vpop.permute.xlu0 %772
      %774 = vrot.lane.b32.xlu0 %v578, 96
      %v775 = vpop.permute.xlu0 %774
      %776 = vrot.lane.b32.xlu0 %v576, 32
      %v777 = vpop.permute.xlu0 %776
      %778 = vrot.lane.b32.xlu0 %v578, 32
      %v779 = vpop.permute.xlu0 %778
      %v781 = vsel %vm597, %v773, 0
      %v784 = vsel %vm597, %v775, 0
      %v787 = vsel %vm597, %v777, 0
      %v790 = vsel %vm597, %v779, 0
      %792 = vmatprep.subr.bf16.mxu0 0
      %793 = vmatpush1.bf16.xpose.msra.mxu0 %v787
      %794 = vmatprep.subr.bf16.mxu0 0
      %795 = vmatpush1.bf16.xpose.msra.mxu0 %v790
      %796 = vmatprep.subr.bf16.mxu0 0
      %797 = vmatpush1.bf16.xpose.msra.mxu0 0
      %798 = vmatprep.subr.bf16.mxu0 0
      %799 = vmatpush1.bf16.xpose.msra.mxu0 0
      %800 = vmatprep.subr.bf16.mxu0 0
      %801 = vmatpush1.bf16.xpose.msra.mxu0 0
      %802 = vmatprep.subr.bf16.mxu0 0
      %803 = vmatpush1.bf16.xpose.msra.mxu0 0
      %804 = vmatprep.subr.bf16.mxu0 0
      %805 = vmatpush1.bf16.xpose.msra.mxu0 0
      %806 = vmatprep.subr.bf16.mxu0 0
      %807 = vmatpush1.bf16.xpose.msra.mxu0 0
      %808 = vmatprep.subr.bf16.mxu0 0
      %809 = vmatpush1.bf16.xpose.msra.mxu0 0
      %810 = vmatprep.subr.bf16.mxu0 0
      %811 = vmatpush1.bf16.xpose.msra.mxu0 0
      %812 = vmatprep.subr.bf16.mxu0 0
      %813 = vmatpush1.bf16.xpose.msra.mxu0 0
      %814 = vmatprep.subr.bf16.mxu0 0
      %815 = vmatpush1.bf16.xpose.msra.mxu0 0
      %816 = vmatprep.subr.bf16.mxu0 0
      %817 = vmatpush1.bf16.xpose.msra.mxu0 0
      %818 = vmatprep.subr.bf16.mxu0 0
      %819 = vmatpush1.bf16.xpose.msra.mxu0 0
      %820 = vmatprep.subr.bf16.mxu0 0
      %821 = vmatpush1.bf16.xpose.msra.mxu0 0
      %822 = vmatprep.subr.bf16.mxu0 0
      %823 = vmatpush1.bf16.xpose.msra.mxu0 0
      %824 = vmatprep.mubr.bf16.mxu0 0
      %825 = vmatmul.mubr.bf16.gmra.mrb[0].mxu0 %v781
      %v826 = vpop.f32.mrb[0].mxu0
      %v827 = vadd.f32 0.0, %v826
      %v828 = vpop.f32.mrb[0].mxu0
      %v829 = vpop.f32.mrb[0].mxu0
      %v830 = vadd.f32 0.0, %v829
      %v831 = vpop.f32.mrb[0].mxu0
      %832 = vmatprep.mubr.bf16.mxu0 0
      %833 = vmatmul.mubr.bf16.gmra.mrb[0].mxu0 %v784
      %v834 = vpop.f32.mrb[0].mxu0
      %v835 = vadd.f32 0.0, %v834
      %v836 = vpop.f32.mrb[0].mxu0
      %v837 = vpop.f32.mrb[0].mxu0
      %v838 = vadd.f32 0.0, %v837
      %v839 = vpop.f32.mrb[0].mxu0
      %840 = vdwg.mxu0
      %v841 = vmul.f32 %v827, 0.17677669
      %v842 = vmul.f32 %v830, 0.17677669
      %v843 = vmul.f32 %v835, 0.17677669
      %v844 = vmul.f32 %v838, 0.17677669
      %v845 = vsel %vm587, %v841, -1e+30
      %v846 = vsel %vm588, %v842, -1e+30
      %v847 = vsel %vm589, %v843, -1e+30
      %v848 = vsel %vm590, %v844, -1e+30
      %v849 = vsel %vm597, %v845, -inf
      %850 = vmax.xlane.f32.xlu0 %v849
      %v851 = vpop.xlane.xlu0 %850
      %v852 = vsel %vm597, %v846, -inf
      %853 = vmax.xlane.f32.xlu0 %v852
      %v854 = vpop.xlane.xlu0 %853
      %v855 = vsel %vm597, %v847, -inf
      %856 = vmax.xlane.f32.xlu0 %v855
      %v857 = vpop.xlane.xlu0 %856
      %v858 = vsel %vm597, %v848, -inf
      %859 = vmax.xlane.f32.xlu0 %v858
      %v860 = vpop.xlane.xlu0 %859
      %v861 = vsub.f32 %v845, %v851
      %v862 = vsub.f32 %v846, %v854
      %v863 = vsub.f32 %v847, %v857
      %v864 = vsub.f32 %v848, %v860
      %v865 = vmul.f32 %v861, 1.442695
      %v866 = vpow.pop %v865
      %v867 = vmul.f32 %v862, 1.442695
      %v868 = vpow.pop %v867
      %v869 = vmul.f32 %v863, 1.442695
      %v870 = vpow.pop %v869
      %v871 = vmul.f32 %v864, 1.442695
      %v872 = vpow.pop %v871
      %v873 = vsel %vm597, %v866, 0.0
      %874 = vadd.xlane.f32.xlu0 %v873
      %v875 = vpop.xlane.xlu0 %874
      %v876 = vsel %vm597, %v868, 0.0
      %877 = vadd.xlane.f32.xlu0 %v876
      %v878 = vpop.xlane.xlu0 %877
      %v879 = vsel %vm597, %v870, 0.0
      %880 = vadd.xlane.f32.xlu0 %v879
      %v881 = vpop.xlane.xlu0 %880
      %v882 = vsel %vm597, %v872, 0.0
      %883 = vadd.xlane.f32.xlu0 %v882
      %v884 = vpop.xlane.xlu0 %883
      %v885 = vpack.c.bf16 %v868, %v866
      %v886 = vpack.c.bf16 %v872, %v870
      %889 = vrot.lane.b32.xlu0 %v577, 96
      %v890 = vpop.permute.xlu0 %889
      %891 = vrot.lane.b32.xlu0 %v579, 96
      %v892 = vpop.permute.xlu0 %891
      %v896 = vsel %vm597, %v885, 0
      %v899 = vsel %vm597, %v886, 0
      %901 = vmatprep.subr.bf16.mxu0 0
      %902 = vmatpush1.bf16.msra.mxu0 %v890
      %903 = vmatprep.subr.bf16.mxu0 0
      %904 = vmatpush1.bf16.msra.mxu0 %v892
      %905 = vmatprep.subr.bf16.mxu0 0
      %906 = vmatpush1.bf16.msra.mxu0 0
      %907 = vmatprep.subr.bf16.mxu0 0
      %908 = vmatpush1.bf16.msra.mxu0 0
      %909 = vmatprep.subr.bf16.mxu0 0
      %910 = vmatpush1.bf16.msra.mxu0 0
      %911 = vmatprep.subr.bf16.mxu0 0
      %912 = vmatpush1.bf16.msra.mxu0 0
      %913 = vmatprep.subr.bf16.mxu0 0
      %914 = vmatpush1.bf16.msra.mxu0 0
      %915 = vmatprep.subr.bf16.mxu0 0
      %916 = vmatpush1.bf16.msra.mxu0 0
      %917 = vmatprep.subr.bf16.mxu0 0
      %918 = vmatpush1.bf16.msra.mxu0 0
      %919 = vmatprep.subr.bf16.mxu0 0
      %920 = vmatpush1.bf16.msra.mxu0 0
      %921 = vmatprep.subr.bf16.mxu0 0
      %922 = vmatpush1.bf16.msra.mxu0 0
      %923 = vmatprep.subr.bf16.mxu0 0
      %924 = vmatpush1.bf16.msra.mxu0 0
      %925 = vmatprep.subr.bf16.mxu0 0
      %926 = vmatpush1.bf16.msra.mxu0 0
      %927 = vmatprep.subr.bf16.mxu0 0
      %928 = vmatpush1.bf16.msra.mxu0 0
      %929 = vmatprep.subr.bf16.mxu0 0
      %930 = vmatpush1.bf16.msra.mxu0 0
      %931 = vmatprep.subr.bf16.mxu0 0
      %932 = vmatpush1.bf16.msra.mxu0 0
      %933 = vmatprep.mubr.bf16.mxu0 0
      %934 = vmatmul.mubr.bf16.gmra.mrb[0].mxu0 %v896
      %v935 = vpop.f32.mrb[0].mxu0
      %v936 = vadd.f32 0.0, %v935
      %v937 = vpop.f32.mrb[0].mxu0
      %v938 = vpop.f32.mrb[0].mxu0
      %v939 = vadd.f32 0.0, %v938
      %v940 = vpop.f32.mrb[0].mxu0
      %941 = vmatprep.mubr.bf16.mxu0 0
      %942 = vmatmul.mubr.bf16.gmra.mrb[0].mxu0 %v899
      %v943 = vpop.f32.mrb[0].mxu0
      %v944 = vadd.f32 0.0, %v943
      %v945 = vpop.f32.mrb[0].mxu0
      %v946 = vpop.f32.mrb[0].mxu0
      %v947 = vadd.f32 0.0, %v946
      %v948 = vpop.f32.mrb[0].mxu0
      %949 = vdwg.mxu0
      %v950 = vrcp.pop %v875
      %v951 = vrcp.pop %v878
      %v952 = vrcp.pop %v881
      %v953 = vrcp.pop %v884
      %v954 = vmul.f32 %v936, %v950
      %v955 = vmul.f32 %v939, %v951
      %v956 = vmul.f32 %v944, %v952
      %v957 = vmul.f32 %v947, %v953
      %962 = vrot.lane.b32.xlu0 %v954, 32
      %v963 = vpop.permute.xlu0 %962
      %964 = vrot.lane.b32.xlu0 %v955, 32
      %v965 = vpop.permute.xlu0 %964
      %966 = vrot.lane.b32.xlu0 %v956, 32
      %v967 = vpop.permute.xlu0 %966
      %968 = vrot.lane.b32.xlu0 %v957, 32
      %v969 = vpop.permute.xlu0 %968
      %vm974 = vcmask 523520
      %975 = vst.msk [vmem:[#allocation2] sm:$0xff] %vm974, %v963
      %976 = vst.msk [vmem:[#allocation2 + $0x8] sm:$0xff] %vm974, %v965
      %977 = vst.msk [vmem:[#allocation2 + $0x10] sm:$0xff] %vm974, %v967
      %978 = vst.msk [vmem:[#allocation2 + $0x18] sm:$0xff] %vm974, %v969
      %v979 = vld [vmem:[#allocation2] sm:$0xff]
      %v980 = vld [vmem:[#allocation2 + $0x8] sm:$0xff]
      %v981 = vld [vmem:[#allocation2 + $0x10] sm:$0xff]
      %v982 = vld [vmem:[#allocation2 + $0x18] sm:$0xff]
      %v983 = vpack.c.bf16 %v980, %v979
      %v984 = vpack.c.bf16 %v982, %v981
      %v985 = vld [vmem:[%s389] sm:$0xf]
      %v986 = vld [vmem:[%s389 + $0x4] sm:$0xf]
      %v987 = vld [vmem:[%s389 + $0x8] sm:$0xf]
      %v988 = vld [vmem:[%s389 + $0xc] sm:$0xf]
      %v989 = vld [vmem:[%s389 + $0x10] sm:$0xf]
      %v990 = vld [vmem:[%s389 + $0x14] sm:$0xf]
      %v991 = vld [vmem:[%s389 + $0x18] sm:$0xf]
      %v992 = vld [vmem:[%s389 + $0x1c] sm:$0xf]
      %v1001 = vunpack.c.l.b16 %v985
      %v1002 = vunpack.c.l.b16 %v986
      %v1003 = vunpack.c.l.b16 %v987
      %v1004 = vunpack.c.l.b16 %v988
      %v1005 = vunpack.c.l.b16 %v989
      %v1006 = vunpack.c.l.b16 %v990
      %v1007 = vunpack.c.l.b16 %v991
      %v1008 = vunpack.c.l.b16 %v992
      %v1009 = vpack.c.b16 %v1002, %v1001
      %v1010 = vpack.c.b16 %v1004, %v1003
      %v1011 = vpack.c.b16 %v1006, %v1005
      %v1012 = vpack.c.b16 %v1008, %v1007
      %v1018 = vsel %vm429, %v983, 0
      %v1021 = vsel %vm429, %v984, 0
      %1023 = vmatprep.subr.bf16.mxu0 0
      %1024 = vmatpush1.bf16.msra.mxu0 %v1009
      %1025 = vmatprep.subr.bf16.mxu0 0
      %1026 = vmatpush1.bf16.msra.mxu0 %v1010
      %1027 = vmatprep.subr.bf16.mxu0 0
      %1028 = vmatpush1.bf16.msra.mxu0 %v1011
      %1029 = vmatprep.subr.bf16.mxu0 0
      %1030 = vmatpush1.bf16.msra.mxu0 %v1012
      %1031 = vmatprep.subr.bf16.mxu0 0
      %1032 = vmatpush1.bf16.msra.mxu0 0
      %1033 = vmatprep.subr.bf16.mxu0 0
      %1034 = vmatpush1.bf16.msra.mxu0 0
      %1035 = vmatprep.subr.bf16.mxu0 0
      %1036 = vmatpush1.bf16.msra.mxu0 0
      %1037 = vmatprep.subr.bf16.mxu0 0
      %1038 = vmatpush1.bf16.msra.mxu0 0
      %1039 = vmatprep.subr.bf16.mxu0 0
      %1040 = vmatpush1.bf16.msra.mxu0 0
      %1041 = vmatprep.subr.bf16.mxu0 0
      %1042 = vmatpush1.bf16.msra.mxu0 0
      %1043 = vmatprep.subr.bf16.mxu0 0
      %1044 = vmatpush1.bf16.msra.mxu0 0
      %1045 = vmatprep.subr.bf16.mxu0 0
      %1046 = vmatpush1.bf16.msra.mxu0 0
      %1047 = vmatprep.subr.bf16.mxu0 0
      %1048 = vmatpush1.bf16.msra.mxu0 0
      %1049 = vmatprep.subr.bf16.mxu0 0
      %1050 = vmatpush1.bf16.msra.mxu0 0
      %1051 = vmatprep.subr.bf16.mxu0 0
      %1052 = vmatpush1.bf16.msra.mxu0 0
      %1053 = vmatprep.subr.bf16.mxu0 0
      %1054 = vmatpush1.bf16.msra.mxu0 0
      %1055 = vmatprep.mubr.bf16.mxu0 0
      %1056 = vmatmul.mubr.bf16.gmra.mrb[0].mxu0 %v1018
      %v1057 = vpop.f32.mrb[0].mxu0
      %v1058 = vadd.f32 0.0, %v1057
      %v1059 = vpop.f32.mrb[0].mxu0
      %v1060 = vpop.f32.mrb[0].mxu0
      %v1061 = vadd.f32 0.0, %v1060
      %v1062 = vpop.f32.mrb[0].mxu0
      %1063 = vmatprep.mubr.bf16.mxu0 0
      %1064 = vmatmul.mubr.bf16.gmra.mrb[0].mxu0 %v1021
      %v1065 = vpop.f32.mrb[0].mxu0
      %v1066 = vadd.f32 0.0, %v1065
      %v1067 = vpop.f32.mrb[0].mxu0
      %v1068 = vpop.f32.mrb[0].mxu0
      %v1069 = vadd.f32 0.0, %v1068
      %v1070 = vpop.f32.mrb[0].mxu0
      %1071 = vdwg.mxu0
      %v1072 = vadd.f32 %v419, %v1058
      %v1073 = vadd.f32 %v420, %v1061
      %v1074 = vadd.f32 %v421, %v1066
      %v1075 = vadd.f32 %v422, %v1069
      %v1076 = vmul.f32 %v1072, %v1072
      %v1077 = vmul.f32 %v1073, %v1073
      %v1078 = vmul.f32 %v1074, %v1074
      %v1079 = vmul.f32 %v1075, %v1075
      %v1080 = vsel %vm429, %v1076, 0.0
      %1081 = vadd.xlane.f32.xlu0 %v1080
      %v1082 = vpop.xlane.xlu0 %1081
      %v1083 = vsel %vm429, %v1077, 0.0
      %1084 = vadd.xlane.f32.xlu0 %v1083
      %v1085 = vpop.xlane.xlu0 %1084
      %v1086 = vsel %vm429, %v1078, 0.0
      %1087 = vadd.xlane.f32.xlu0 %v1086
      %v1088 = vpop.xlane.xlu0 %1087
      %v1089 = vsel %vm429, %v1079, 0.0
      %1090 = vadd.xlane.f32.xlu0 %v1089
      %v1091 = vpop.xlane.xlu0 %1090
      %v1092 = vmul.f32 %v1082, %v442
      %v1093 = vmul.f32 %v1085, %v442
      %v1094 = vmul.f32 %v1088, %v442
      %v1095 = vmul.f32 %v1091, %v442
      %v1096 = vadd.f32 %v1092, 1e-06
      %v1097 = vadd.f32 %v1093, 1e-06
      %v1098 = vadd.f32 %v1094, 1e-06
      %v1099 = vadd.f32 %v1095, 1e-06
      %v1100 = vrsqrt.pop %v1096
      %v1101 = vrsqrt.pop %v1097
      %v1102 = vrsqrt.pop %v1098
      %v1103 = vrsqrt.pop %v1099
      %v1104 = vmul.f32 %v1072, %v1100
      %v1105 = vmul.f32 %v1073, %v1101
      %v1106 = vmul.f32 %v1074, %v1102
      %v1107 = vmul.f32 %v1075, %v1103
      %v1108 = vlaneseq
      %v1109 = vshrl.u32 %v1108, 7
      %v1110 = vsub.s32 1, %v1109
      %v1111 = vrot.slane %v423, %v1110
      %v1112 = vmul.f32 %v1104, %v1111
      %v1113 = vmul.f32 %v1105, %v1111
      %v1114 = vmul.f32 %v1106, %v1111
      %v1115 = vmul.f32 %v1107, %v1111
      %v1116 = vpack.c.bf16 %v1113, %v1112
      %v1117 = vpack.c.bf16 %v1115, %v1114
      %v1118 = vld [vmem:[%s394] sm:$0xff]
      %v1119 = vld [vmem:[%s394 + $0x8] sm:$0xff]
      %v1120 = vld [vmem:[%s394 + $0x10] sm:$0xff]
      %v1121 = vld [vmem:[%s394 + $0x18] sm:$0xff]
      %v1122 = vld [vmem:[%s394 + $0x20] sm:$0xff]
      %v1123 = vld [vmem:[%s394 + $0x28] sm:$0xff]
      %v1124 = vld [vmem:[%s394 + $0x30] sm:$0xff]
      %v1125 = vld [vmem:[%s394 + $0x38] sm:$0xff]
      %v1127 = vlaneseq
      %v1128 = vshrl.u32 %v1127, 7
      %v1129 = vsub.s32 0, %v1128
      %v1130 = vrot.slane %v424, %v1129
      %v1131 = vlaneseq
      %v1132 = vshrl.u32 %v1131, 7
      %v1133 = vsub.s32 1, %v1132
      %v1134 = vrot.slane %v424, %v1133
      %v1145 = vunpack.c.l.b16 %v1118
      %v1146 = vunpack.c.h.b16 %v1118
      %v1147 = vunpack.c.l.b16 %v1119
      %v1148 = vunpack.c.h.b16 %v1119
      %v1149 = vunpack.c.l.b16 %v1120
      %v1150 = vunpack.c.h.b16 %v1120
      %v1151 = vunpack.c.l.b16 %v1121
      %v1152 = vunpack.c.h.b16 %v1121
      %v1153 = vunpack.c.l.b16 %v1122
      %v1154 = vunpack.c.h.b16 %v1122
      %v1155 = vunpack.c.l.b16 %v1123
      %v1156 = vunpack.c.h.b16 %v1123
      %v1157 = vunpack.c.l.b16 %v1124
      %v1158 = vunpack.c.h.b16 %v1124
      %v1159 = vunpack.c.l.b16 %v1125
      %v1160 = vunpack.c.h.b16 %v1125
      %v1161 = vpack.c.b16 %v1147, %v1145
      %v1162 = vpack.c.b16 %v1148, %v1146
      %v1163 = vpack.c.b16 %v1151, %v1149
      %v1164 = vpack.c.b16 %v1152, %v1150
      %v1165 = vpack.c.b16 %v1155, %v1153
      %v1166 = vpack.c.b16 %v1156, %v1154
      %v1167 = vpack.c.b16 %v1159, %v1157
      %v1168 = vpack.c.b16 %v1160, %v1158
      %v1178 = vsel %vm429, %v1116, 0
      %v1181 = vsel %vm429, %v1117, 0
      %1183 = vmatprep.subr.bf16.mxu0 %v1162
      %1184 = vmatpush1.bf16.msra.mxu0 %v1161
      %1185 = vmatprep.subr.bf16.mxu0 %v1164
      %1186 = vmatpush1.bf16.msra.mxu0 %v1163
      %1187 = vmatprep.subr.bf16.mxu0 %v1166
      %1188 = vmatpush1.bf16.msra.mxu0 %v1165
      %1189 = vmatprep.subr.bf16.mxu0 %v1168
      %1190 = vmatpush1.bf16.msra.mxu0 %v1167
      %1191 = vmatprep.subr.bf16.mxu0 0
      %1192 = vmatpush1.bf16.msra.mxu0 0
      %1193 = vmatprep.subr.bf16.mxu0 0
      %1194 = vmatpush1.bf16.msra.mxu0 0
      %1195 = vmatprep.subr.bf16.mxu0 0
      %1196 = vmatpush1.bf16.msra.mxu0 0
      %1197 = vmatprep.subr.bf16.mxu0 0
      %1198 = vmatpush1.bf16.msra.mxu0 0
      %1199 = vmatprep.subr.bf16.mxu0 0
      %1200 = vmatpush1.bf16.msra.mxu0 0
      %1201 = vmatprep.subr.bf16.mxu0 0
      %1202 = vmatpush1.bf16.msra.mxu0 0
      %1203 = vmatprep.subr.bf16.mxu0 0
      %1204 = vmatpush1.bf16.msra.mxu0 0
      %1205 = vmatprep.subr.bf16.mxu0 0
      %1206 = vmatpush1.bf16.msra.mxu0 0
      %1207 = vmatprep.subr.bf16.mxu0 0
      %1208 = vmatpush1.bf16.msra.mxu0 0
      %1209 = vmatprep.subr.bf16.mxu0 0
      %1210 = vmatpush1.bf16.msra.mxu0 0
      %1211 = vmatprep.subr.bf16.mxu0 0
      %1212 = vmatpush1.bf16.msra.mxu0 0
      %1213 = vmatprep.subr.bf16.mxu0 0
      %1214 = vmatpush1.bf16.msra.mxu0 0
      %1215 = vmatprep.mubr.bf16.mxu0 0
      %1216 = vmatmul.mubr.bf16.gmra.mrb[0].mxu0 %v1178
      %v1217 = vpop.f32.mrb[0].mxu0
      %v1218 = vadd.f32 %v1130, %v1217
      %v1219 = vpop.f32.mrb[0].mxu0
      %v1220 = vadd.f32 %v1134, %v1219
      %v1221 = vpop.f32.mrb[0].mxu0
      %v1222 = vadd.f32 %v1130, %v1221
      %v1223 = vpop.f32.mrb[0].mxu0
      %v1224 = vadd.f32 %v1134, %v1223
      %1225 = vmatprep.mubr.bf16.mxu0 0
      %1226 = vmatmul.mubr.bf16.gmra.mrb[0].mxu0 %v1181
      %v1227 = vpop.f32.mrb[0].mxu0
      %v1228 = vadd.f32 %v1130, %v1227
      %v1229 = vpop.f32.mrb[0].mxu0
      %v1230 = vadd.f32 %v1134, %v1229
      %v1231 = vpop.f32.mrb[0].mxu0
      %v1232 = vadd.f32 %v1130, %v1231
      %v1233 = vpop.f32.mrb[0].mxu0
      %v1234 = vadd.f32 %v1134, %v1233
      %1235 = vdwg.mxu0
      %v1236 = vxor.u32 %v1218, 2147483648
      %v1237 = vxor.u32 %v1220, 2147483648
      %v1238 = vxor.u32 %v1222, 2147483648
      %v1239 = vxor.u32 %v1224, 2147483648
      %v1240 = vxor.u32 %v1228, 2147483648
      %v1241 = vxor.u32 %v1230, 2147483648
      %v1242 = vxor.u32 %v1232, 2147483648
      %v1243 = vxor.u32 %v1234, 2147483648
      %v1244 = vmul.f32 %v1236, 1.442695
      %v1245 = vpow.pop %v1244
      %v1246 = vmul.f32 %v1237, 1.442695
      %v1247 = vpow.pop %v1246
      %v1248 = vmul.f32 %v1238, 1.442695
      %v1249 = vpow.pop %v1248
      %v1250 = vmul.f32 %v1239, 1.442695
      %v1251 = vpow.pop %v1250
      %v1252 = vmul.f32 %v1240, 1.442695
      %v1253 = vpow.pop %v1252
      %v1254 = vmul.f32 %v1241, 1.442695
      %v1255 = vpow.pop %v1254
      %v1256 = vmul.f32 %v1242, 1.442695
      %v1257 = vpow.pop %v1256
      %v1258 = vmul.f32 %v1243, 1.442695
      %v1259 = vpow.pop %v1258
      %v1260 = vadd.f32 %v1245, 1.0
      %v1261 = vadd.f32 %v1247, 1.0
      %v1262 = vadd.f32 %v1249, 1.0
      %v1263 = vadd.f32 %v1251, 1.0
      %v1264 = vadd.f32 %v1253, 1.0
      %v1265 = vadd.f32 %v1255, 1.0
      %v1266 = vadd.f32 %v1257, 1.0
      %v1267 = vadd.f32 %v1259, 1.0
      %v1268 = vrcp.pop %v1260
      %v1269 = vmul.f32 1.0, %v1268
      %v1270 = vrcp.pop %v1261
      %v1271 = vmul.f32 1.0, %v1270
      %v1272 = vrcp.pop %v1262
      %v1273 = vmul.f32 1.0, %v1272
      %v1274 = vrcp.pop %v1263
      %v1275 = vmul.f32 1.0, %v1274
      %v1276 = vrcp.pop %v1264
      %v1277 = vmul.f32 1.0, %v1276
      %v1278 = vrcp.pop %v1265
      %v1279 = vmul.f32 1.0, %v1278
      %v1280 = vrcp.pop %v1266
      %v1281 = vmul.f32 1.0, %v1280
      %v1282 = vrcp.pop %v1267
      %v1283 = vmul.f32 1.0, %v1282
      %v1284 = vmul.f32 %v1218, %v1269
      %v1285 = vmul.f32 %v1220, %v1271
      %v1286 = vmul.f32 %v1222, %v1273
      %v1287 = vmul.f32 %v1224, %v1275
      %v1288 = vmul.f32 %v1228, %v1277
      %v1289 = vmul.f32 %v1230, %v1279
      %v1290 = vmul.f32 %v1232, %v1281
      %v1291 = vmul.f32 %v1234, %v1283
      %v1292 = vpack.c.bf16 %v1286, %v1284
      %v1293 = vpack.c.bf16 %v1287, %v1285
      %v1294 = vpack.c.bf16 %v1290, %v1288
      %v1295 = vpack.c.bf16 %v1291, %v1289
      %v1296 = vld [vmem:[%s399] sm:$0xf]
      %v1297 = vld [vmem:[%s399 + $0x4] sm:$0xf]
      %v1298 = vld [vmem:[%s399 + $0x8] sm:$0xf]
      %v1299 = vld [vmem:[%s399 + $0xc] sm:$0xf]
      %v1300 = vld [vmem:[%s399 + $0x10] sm:$0xf]
      %v1301 = vld [vmem:[%s399 + $0x14] sm:$0xf]
      %v1302 = vld [vmem:[%s399 + $0x18] sm:$0xf]
      %v1303 = vld [vmem:[%s399 + $0x1c] sm:$0xf]
      %v1304 = vld [vmem:[%s399 + $0x20] sm:$0xf]
      %v1305 = vld [vmem:[%s399 + $0x24] sm:$0xf]
      %v1306 = vld [vmem:[%s399 + $0x28] sm:$0xf]
      %v1307 = vld [vmem:[%s399 + $0x2c] sm:$0xf]
      %v1308 = vld [vmem:[%s399 + $0x30] sm:$0xf]
      %v1309 = vld [vmem:[%s399 + $0x34] sm:$0xf]
      %v1310 = vld [vmem:[%s399 + $0x38] sm:$0xf]
      %v1311 = vld [vmem:[%s399 + $0x3c] sm:$0xf]
      %v1312 = vld [vmem:[%s399 + $0x40] sm:$0xf]
      %v1313 = vld [vmem:[%s399 + $0x44] sm:$0xf]
      %v1314 = vld [vmem:[%s399 + $0x48] sm:$0xf]
      %v1315 = vld [vmem:[%s399 + $0x4c] sm:$0xf]
      %v1316 = vld [vmem:[%s399 + $0x50] sm:$0xf]
      %v1317 = vld [vmem:[%s399 + $0x54] sm:$0xf]
      %v1318 = vld [vmem:[%s399 + $0x58] sm:$0xf]
      %v1319 = vld [vmem:[%s399 + $0x5c] sm:$0xf]
      %v1320 = vld [vmem:[%s399 + $0x60] sm:$0xf]
      %v1321 = vld [vmem:[%s399 + $0x64] sm:$0xf]
      %v1322 = vld [vmem:[%s399 + $0x68] sm:$0xf]
      %v1323 = vld [vmem:[%s399 + $0x6c] sm:$0xf]
      %v1324 = vld [vmem:[%s399 + $0x70] sm:$0xf]
      %v1325 = vld [vmem:[%s399 + $0x74] sm:$0xf]
      %v1326 = vld [vmem:[%s399 + $0x78] sm:$0xf]
      %v1327 = vld [vmem:[%s399 + $0x7c] sm:$0xf]
      %v1360 = vunpack.c.l.b16 %v1296
      %v1361 = vunpack.c.l.b16 %v1297
      %v1362 = vunpack.c.l.b16 %v1298
      %v1363 = vunpack.c.l.b16 %v1299
      %v1364 = vunpack.c.l.b16 %v1300
      %v1365 = vunpack.c.l.b16 %v1301
      %v1366 = vunpack.c.l.b16 %v1302
      %v1367 = vunpack.c.l.b16 %v1303
      %v1368 = vunpack.c.l.b16 %v1304
      %v1369 = vunpack.c.l.b16 %v1305
      %v1370 = vunpack.c.l.b16 %v1306
      %v1371 = vunpack.c.l.b16 %v1307
      %v1372 = vunpack.c.l.b16 %v1308
      %v1373 = vunpack.c.l.b16 %v1309
      %v1374 = vunpack.c.l.b16 %v1310
      %v1375 = vunpack.c.l.b16 %v1311
      %v1376 = vunpack.c.l.b16 %v1312
      %v1377 = vunpack.c.l.b16 %v1313
      %v1378 = vunpack.c.l.b16 %v1314
      %v1379 = vunpack.c.l.b16 %v1315
      %v1380 = vunpack.c.l.b16 %v1316
      %v1381 = vunpack.c.l.b16 %v1317
      %v1382 = vunpack.c.l.b16 %v1318
      %v1383 = vunpack.c.l.b16 %v1319
      %v1384 = vunpack.c.l.b16 %v1320
      %v1385 = vunpack.c.l.b16 %v1321
      %v1386 = vunpack.c.l.b16 %v1322
      %v1387 = vunpack.c.l.b16 %v1323
      %v1388 = vunpack.c.l.b16 %v1324
      %v1389 = vunpack.c.l.b16 %v1325
      %v1390 = vunpack.c.l.b16 %v1326
      %v1391 = vunpack.c.l.b16 %v1327
      %v1392 = vpack.c.b16 %v1361, %v1360
      %v1393 = vpack.c.b16 %v1363, %v1362
      %v1394 = vpack.c.b16 %v1365, %v1364
      %v1395 = vpack.c.b16 %v1367, %v1366
      %v1396 = vpack.c.b16 %v1369, %v1368
      %v1397 = vpack.c.b16 %v1371, %v1370
      %v1398 = vpack.c.b16 %v1373, %v1372
      %v1399 = vpack.c.b16 %v1375, %v1374
      %v1400 = vpack.c.b16 %v1377, %v1376
      %v1401 = vpack.c.b16 %v1379, %v1378
      %v1402 = vpack.c.b16 %v1381, %v1380
      %v1403 = vpack.c.b16 %v1383, %v1382
      %v1404 = vpack.c.b16 %v1385, %v1384
      %v1405 = vpack.c.b16 %v1387, %v1386
      %v1406 = vpack.c.b16 %v1389, %v1388
      %v1407 = vpack.c.b16 %v1391, %v1390
      %1424 = vmatprep.subr.bf16.mxu0 0
      %1425 = vmatpush1.bf16.msra.mxu0 %v1392
      %1426 = vmatprep.subr.bf16.mxu0 0
      %1427 = vmatpush1.bf16.msra.mxu0 %v1393
      %1428 = vmatprep.subr.bf16.mxu0 0
      %1429 = vmatpush1.bf16.msra.mxu0 %v1394
      %1430 = vmatprep.subr.bf16.mxu0 0
      %1431 = vmatpush1.bf16.msra.mxu0 %v1395
      %1432 = vmatprep.subr.bf16.mxu0 0
      %1433 = vmatpush1.bf16.msra.mxu0 %v1396
      %1434 = vmatprep.subr.bf16.mxu0 0
      %1435 = vmatpush1.bf16.msra.mxu0 %v1397
      %1436 = vmatprep.subr.bf16.mxu0 0
      %1437 = vmatpush1.bf16.msra.mxu0 %v1398
      %1438 = vmatprep.subr.bf16.mxu0 0
      %1439 = vmatpush1.bf16.msra.mxu0 %v1399
      %1440 = vmatprep.subr.bf16.mxu0 0
      %1441 = vmatpush1.bf16.msra.mxu0 %v1400
      %1442 = vmatprep.subr.bf16.mxu0 0
      %1443 = vmatpush1.bf16.msra.mxu0 %v1401
      %1444 = vmatprep.subr.bf16.mxu0 0
      %1445 = vmatpush1.bf16.msra.mxu0 %v1402
      %1446 = vmatprep.subr.bf16.mxu0 0
      %1447 = vmatpush1.bf16.msra.mxu0 %v1403
      %1448 = vmatprep.subr.bf16.mxu0 0
      %1449 = vmatpush1.bf16.msra.mxu0 %v1404
      %1450 = vmatprep.subr.bf16.mxu0 0
      %1451 = vmatpush1.bf16.msra.mxu0 %v1405
      %1452 = vmatprep.subr.bf16.mxu0 0
      %1453 = vmatpush1.bf16.msra.mxu0 %v1406
      %1454 = vmatprep.subr.bf16.mxu0 0
      %1455 = vmatpush1.bf16.msra.mxu0 %v1407
      %1456 = vmatprep.mubr.bf16.mxu0 %v1293
      %1457 = vmatmul.mubr.bf16.gmra.mrb[0].mxu0 %v1292
      %v1458 = vpop.f32.mrb[0].mxu0
      %v1459 = vadd.f32 0.0, %v1458
      %v1460 = vpop.f32.mrb[0].mxu0
      %v1461 = vpop.f32.mrb[0].mxu0
      %v1462 = vadd.f32 0.0, %v1461
      %v1463 = vpop.f32.mrb[0].mxu0
      %1464 = vmatprep.mubr.bf16.mxu0 %v1295
      %1465 = vmatmul.mubr.bf16.gmra.mrb[0].mxu0 %v1294
      %v1466 = vpop.f32.mrb[0].mxu0
      %v1467 = vadd.f32 0.0, %v1466
      %v1468 = vpop.f32.mrb[0].mxu0
      %v1469 = vpop.f32.mrb[0].mxu0
      %v1470 = vadd.f32 0.0, %v1469
      %v1471 = vpop.f32.mrb[0].mxu0
      %1472 = vdwg.mxu0
      %v1473 = vadd.f32 %v1072, %v1459
      %v1474 = vadd.f32 %v1073, %v1462
      %v1475 = vadd.f32 %v1074, %v1467
      %v1476 = vadd.f32 %v1075, %v1470
      %v1477 = vlaneseq
      %v1478 = vshrl.u32 %v1477, 7
      %v1479 = vsub.s32 2, %v1478
      %v1480 = vrot.slane %v423, %v1479
      %v1481 = vadd.f32 %v1473, %v1480
      %v1482 = vadd.f32 %v1474, %v1480
      %v1483 = vadd.f32 %v1475, %v1480
      %v1484 = vadd.f32 %v1476, %v1480
      %1485 = vst.msk [vmem:[%s404] sm:$0xff] %vm429, %v1481
      %1486 = vst.msk [vmem:[%s404 + $0x8] sm:$0xff] %vm429, %v1482
      %1487 = vst.msk [vmem:[%s404 + $0x10] sm:$0xff] %vm429, %v1483
      %1488 = vst.msk [vmem:[%s404 + $0x18] sm:$0xff] %vm429, %v1484
      %p1489 = scmp.lt.s32.totalorder %s22, 1
      %s1490 = scalar_select %p1489, %s22, 1
      %s1491 = smul.addr %s1490, 4
      %s1492 = smul.addr %s1491, 8
      %s1493 = scalar_lea.vmem %s7, %s1492
      // Predicated region
      $region53: #{t3_for_finetuning_forward.2} parent=47 // pred_check
        %p1494 = pneg %p230
      $region54: #{t3_for_finetuning_forward.2} parent=47 // pred_check_branch
        %1496 = sbr.rel (%p1494) target = $region56
      $region55: #{t3_for_finetuning_forward.2} parent=47 // pred_region
        _
      $region56: #{t3_for_finetuning_forward.2} parent=47 // pred_fallthru
        _
    $region48: #{t3_for_finetuning_forward.2} parent=5 // pred_fallthru
      _
    %p1497 = scmp.le.s32.totalorder 2, %s13
    // Predicated region
    $region57: #{t3_for_finetuning_forward.2} parent=5 // pred_check
      %p1498 = pneg %p1497
    $region58: #{t3_for_finetuning_forward.2} parent=5 // pred_check_branch
      %1500 = sbr.rel (%p1498) target = $region60
    $region59: #{t3_for_finetuning_forward.2} parent=5 // pred_region
      %s1501 = ssub.s32 %s13, 2
      // Predicated region
      $region61: #{t3_for_finetuning_forward.2} parent=59 // pred_check
        %p1502 = pneg %p236
      $region62: #{t3_for_finetuning_forward.2} parent=59 // pred_check_branch
        %1504 = sbr.rel (%p1502) target = $region64
      $region63: #{t3_for_finetuning_forward.2} parent=59 // pred_region
        %p1505 = scmp.lt.s32.totalorder %s24, 1
        %s1506 = scalar_select %p1505, %s24, 1
        %s1507 = smul.addr %s1506, 4
        %s1508 = smul.addr %s1507, 8
        %s1509 = scalar_lea.vmem %s7, %s1508
      $region64: #{t3_for_finetuning_forward.2} parent=59 // pred_fallthru
        _
    $region60: #{t3_for_finetuning_forward.2} parent=5 // pred_fallthru
      _
  $region6: #{t3_for_finetuning_forward.2} parent=0 // loop_footer
    %s17 = sadd.s32 1, %s13
  $region7: #{t3_for_finetuning_forward.2} parent=0 // loop_footer_branch
    %12 = sbr.rel target = $region3
  $region8: #{t3_for_finetuning_forward.2} parent=0 // loop_exit
    _

</llo_original>
